<compile_context>
chip_gen: v7x
topology: tpu7x:2x2x1
jax: 0.10.0
libtpu: 0.0.40
codegen_flags: <defaults>
</compile_context>

<pallas_src>
import math
import functools

import jax
import jax.numpy as jnp
from jax.experimental import pallas as pl
from jax.experimental.pallas import tpu as pltpu


# ----------------------------------------------------------------------------
# Fused kernel: one (batch, q-tile) output block, looped over kv tiles.
#   q_ref : (1, H, Tq, d_k)   k_ref/v_ref : (1, H, Tk, d_k)
#   w_ref : (H, d_k, d_model)   (pre-transposed: y = sum_h ctx_h @ w_ref[h])
#   o_ref : (1, Tq, d_model)
#   acc_ref : (H, Tq, d_k) f32 ; m_ref/l_ref : (H, Tq, 1) f32
# ----------------------------------------------------------------------------
def _fused_mha_kernel(q_ref, k_ref, v_ref, w_ref, o_ref,
                      acc_ref, m_ref, l_ref, *,
                      num_heads, scale, mxu_dtype, unroll_heads):
    ki = pl.program_id(2)
    nk = pl.num_programs(2)

    @pl.when(ki == 0)
    def _init():
        m_ref[...] = jnp.full(m_ref.shape, -jnp.inf, dtype=jnp.float32)
        l_ref[...] = jnp.zeros(l_ref.shape, dtype=jnp.float32)
        acc_ref[...] = jnp.zeros(acc_ref.shape, dtype=jnp.float32)

    def _attend_head(hd):
        # Dense per-head slabs via leading-axis indexing (no lane slicing).
        # Scale is folded into q here (one Tq*d_k multiply per head per step).
        q_h = (q_ref[0, hd] * scale).astype(mxu_dtype)          # (Tq, d_k)
        k_h = k_ref[0, hd].astype(mxu_dtype)                    # (Tk, d_k)
        v_h = v_ref[0, hd].astype(mxu_dtype)                    # (Tk, d_k)

        # scores = (q*scale) @ k^T  (contract over d_k; no in-kernel transpose)
        s = jax.lax.dot_general(
            q_h, k_h, (((1,), (1,)), ((), ())),
            preferred_element_type=jnp.float32)                 # (Tq, Tk) f32

        # online-softmax update (f32; exp stays f32 — v5e has no bf16 EUP)
        m_prev = m_ref[hd]                                      # (Tq, 1)
        l_prev = l_ref[hd]
        m_new = jnp.maximum(m_prev, jnp.max(s, axis=-1, keepdims=True))
        alpha = jnp.exp(m_prev - m_new)
        p = jnp.exp(s - m_new)                                  # (Tq, Tk) f32
        l_ref[hd] = alpha * l_prev + jnp.sum(p, axis=-1, keepdims=True)
        m_ref[hd] = m_new

        # context accumulation: MXU fed in mxu_dtype, accumulate f32.
        pv = jnp.dot(p.astype(mxu_dtype), v_h,
                     preferred_element_type=jnp.float32)        # (Tq, d_k)
        acc_ref[hd] = alpha * acc_ref[hd] + pv

    if unroll_heads:
        for hd in range(num_heads):
            _attend_head(hd)
    else:
        # Large H: bound code size / vreg live ranges with a real loop.
        def _body(hd, carry):
            _attend_head(hd)
            return carry
        jax.lax.fori_loop(0, num_heads, _body, 0)

    @pl.when(ki == nk - 1)
    def _finalize():
        out_shape = o_ref.shape[1:]                             # (Tq, d_model)

        def _project_head(hd, y):
            inv_l = 1.0 / l_ref[hd]                             # exact, amortized
            ctx_h = (acc_ref[hd] * inv_l).astype(mxu_dtype)     # (Tq, d_k)
            return y + jnp.dot(ctx_h, w_ref[hd],
                               preferred_element_type=jnp.float32)

        y = jnp.zeros(out_shape, dtype=jnp.float32)
        if unroll_heads:
            for hd in range(num_heads):
                y = _project_head(hd, y)
        else:
            y = jax.lax.fori_loop(0, num_heads, _project_head, y)
        o_ref[0] = y.astype(o_ref.dtype)


# ----------------------------------------------------------------------------
# Helpers
# ----------------------------------------------------------------------------
def _round_up(x, m):
    return (x + m - 1) // m * m


def _padded_vmem_bytes(shape, dtype):
    """Bytes a block occupies in VMEM: last dim pads to 128 lanes, second-to-
    last to the dtype sublane multiple (8 f32 / 16 bf16 / 32 int8-fp8)."""
    itemsize = jnp.dtype(dtype).itemsize
    dims = list(shape)
    if len(dims) >= 1:
        dims[-1] = _round_up(dims[-1], 128)
    if len(dims) >= 2:
        dims[-2] = _round_up(dims[-2], max(8, 32 // itemsize))
    n = 1
    for d in dims:
        n *= d
    return n * itemsize


def _pick_tile(s, cap, itemsize):
    """Largest tile <= cap that divides s and respects the dtype sublane
    multiple.  Falls back to the full axis (block dim == array dim is legal;
    the VMEM limit below is sized from the tiles actually chosen)."""
    if s <= cap:
        return s
    align = max(8, 32 // itemsize)
    for t in range(min(cap, s), align - 1, -1):
        if s % t == 0 and t % align == 0:
            return t
    return s


# ----------------------------------------------------------------------------
# Wrapper
# ----------------------------------------------------------------------------
def multi_headed_attention(query, key, value, w_out, *, h,
                           block_q=512, block_kv=512, prefer_bf16_mxu=True):
    """query/key/value: (B, S, d_model); w_out: (d_model, d_model) PyTorch layout
    (y = x @ w_out.T).  Returns (B, S, d_model)."""
    b, s, d_model = query.shape
    assert d_model % h == 0
    d_k = d_model // h
    itemsize = jnp.dtype(query.dtype).itemsize
    align = max(8, 32 // itemsize)

    # MXU feed dtype: bf16 operands + f32 accumulation when inputs are f32.
    if prefer_bf16_mxu and query.dtype == jnp.float32:
        mxu_dtype = jnp.bfloat16
    else:
        mxu_dtype = query.dtype

    tq = _pick_tile(s, block_q, itemsize)
    tk = _pick_tile(s, block_kv, itemsize)

    # Best effort: give v7x's 2 TensorCores >= 2 'parallel' grid slices.
    while (b * (s // tq) < 2 and tq % 2 == 0 and (tq // 2) % align == 0
           and s % (tq // 2) == 0):
        tq //= 2

    grid = (b, s // tq, s // tk)

    # Head-major views (one XLA-side rewrite; all in-kernel head access is then
    # a dense leading-axis index).
    q_hm = query.reshape(b, s, h, d_k).transpose(0, 2, 1, 3)    # (B,H,S,d_k)
    k_hm = key.reshape(b, s, h, d_k).transpose(0, 2, 1, 3)
    v_hm = value.reshape(b, s, h, d_k).transpose(0, 2, 1, 3)

    # PyTorch layout is (out, in): y = ctx @ W.T = sum_h ctx_h @ (W.T)[h*d_k:(h+1)*d_k].
    w_heads = jnp.transpose(w_out).reshape(h, d_k, d_model).astype(mxu_dtype)

    kernel = functools.partial(
        _fused_mha_kernel, num_heads=h, scale=1.0 / math.sqrt(d_k),
        mxu_dtype=mxu_dtype, unroll_heads=(h <= 8))

    q_spec = pl.BlockSpec((1, h, tq, d_k), lambda bi, qi, ki: (bi, 0, qi, 0))
    k_spec = pl.BlockSpec((1, h, tk, d_k), lambda bi, qi, ki: (bi, 0, ki, 0))
    v_spec = pl.BlockSpec((1, h, tk, d_k), lambda bi, qi, ki: (bi, 0, ki, 0))
    w_spec = pl.BlockSpec((h, d_k, d_model), lambda bi, qi, ki: (0, 0, 0))
    o_spec = pl.BlockSpec((1, tq, d_model), lambda bi, qi, ki: (bi, qi, 0))

    # VMEM estimate: x2 for every default double-buffered pipelined block
    # (including the projection weight), padded scratch sizes counted.
    vmem_est = (
        2 * _padded_vmem_bytes((1, h, tq, d_k), query.dtype)        # q
        + 2 * _padded_vmem_bytes((1, h, tk, d_k), key.dtype)        # k
        + 2 * _padded_vmem_bytes((1, h, tk, d_k), value.dtype)      # v
        + 2 * _padded_vmem_bytes((1, tq, d_model), query.dtype)     # out
        + 2 * _padded_vmem_bytes((h, d_k, d_model), mxu_dtype)      # weight
        + _padded_vmem_bytes((h, tq, d_k), jnp.float32)             # acc
        + 2 * _padded_vmem_bytes((h, tq, 1), jnp.float32)           # m, l
    )

    # Generation-aware VMEM cap (v5e/v6e: 128 MiB, v7x: 64 MiB per TC).
    try:
        vmem_phys = int(pltpu.get_tpu_info().vmem_capacity_bytes)
    except Exception:
        vmem_phys = 64 * 1024 * 1024
    vmem_cap = (vmem_phys * 3) // 4
    vmem_limit = int(min(max((vmem_est * 3) // 2, 32 * 1024 * 1024), vmem_cap))

    out = pl.pallas_call(
        kernel,
        out_shape=jax.ShapeDtypeStruct((b, s, d_model), query.dtype),
        grid_spec=pltpu.PrefetchScalarGridSpec(
            num_scalar_prefetch=0,
            grid=grid,
            in_specs=[q_spec, k_spec, v_spec, w_spec],
            out_specs=o_spec,
            scratch_shapes=[
                pltpu.VMEM((h, tq, d_k), jnp.float32),   # per-head ctx accumulator
                pltpu.VMEM((h, tq, 1), jnp.float32),     # running max
                pltpu.VMEM((h, tq, 1), jnp.float32),     # running sum
            ],
        ),
        compiler_params=pltpu.CompilerParams(
            dimension_semantics=("parallel", "parallel", "arbitrary"),
            vmem_limit_bytes=vmem_limit),
    )(q_hm, k_hm, v_hm, w_heads)
    return out


# ----------------------------------------------------------------------------
# Pure-JAX reference (sanity check)
# ----------------------------------------------------------------------------
def _reference(query, key, value, w_out, *, h):
    b, s, d_model = query.shape
    d_k = d_model // h
    q = query.reshape(b, s, h, d_k).transpose(0, 2, 1, 3)
    k = key.reshape(b, s, h, d_k).transpose(0, 2, 1, 3)
    v = value.reshape(b, s, h, d_k).transpose(0, 2, 1, 3)
    scores = jnp.einsum("bhqd,bhkd->bhqk", q, k) / math.sqrt(d_k)
    p = jax.nn.softmax(scores, axis=-1)
    x = jnp.einsum("bhqk,bhkd->bhqd", p, v)
    x = x.transpose(0, 2, 1, 3).reshape(b, s, d_model)
    return x @ w_out.T


if __name__ == "__main__":
    # Small shapes consistent with the module: h=4, d_model=32, seq=8, batch=2.
    B, S, H, D_MODEL = 2, 8, 4, 32

    key0 = jax.random.PRNGKey(0)
    kq, kk, kv, kw = jax.random.split(key0, 4)
    query = jax.random.normal(kq, (B, S, D_MODEL), dtype=jnp.float32)
    key_in = jax.random.normal(kk, (B, S, D_MODEL), dtype=jnp.float32)
    value = jax.random.normal(kv, (B, S, D_MODEL), dtype=jnp.float32)
    # Deterministic init of output_linear weight (PyTorch layout: (out, in)).
    w_out = jax.random.normal(kw, (D_MODEL, D_MODEL), dtype=jnp.float32) * 0.1

    ref = _reference(query, key_in, value, w_out, h=H)

    # Exact path (f32 MXU feed + exact normalization): tight tolerance.
    out_f32 = multi_headed_attention(query, key_in, value, w_out, h=H,
                                     prefer_bf16_mxu=False)
    out_f32 = jax.block_until_ready(out_f32)
    assert out_f32.shape == (B, S, D_MODEL)
    assert jnp.allclose(out_f32, ref, atol=1e-3, rtol=1e-3), \
        "f32 path mismatch vs reference"

    # Default fast path (bf16 MXU operands, f32 accumulation): bf16 tolerance.
    out_bf16 = multi_headed_attention(query, key_in, value, w_out, h=H)
    out_bf16 = jax.block_until_ready(out_bf16)
    assert out_bf16.shape == (B, S, D_MODEL)
    assert jnp.allclose(out_bf16, ref, atol=5e-2, rtol=5e-2), \
        "bf16-MXU path mismatch vs reference"

    print("KERNEL_OK")
</pallas_src>

<mosaic_0001>
module attributes {stable_mosaic.version = 11 : i64} {
  func.func @_fused_mha_kernel(%arg0: i32, %arg1: i32, %arg2: i32, %arg3: memref<1x4x8x8xf32, #tpu.memory_space<vmem>>, %arg4: memref<1x4x8x8xf32, #tpu.memory_space<vmem>>, %arg5: memref<1x4x8x8xf32, #tpu.memory_space<vmem>>, %arg6: memref<4x8x32xf32, #tpu.memory_space<vmem>>, %arg7: memref<1x8x32xf32, #tpu.memory_space<vmem>>, %arg8: memref<4x8x8xf32, #tpu.memory_space<vmem>>, %arg9: memref<4x8x1xf32, #tpu.memory_space<vmem>>, %arg10: memref<4x8x1xf32, #tpu.memory_space<vmem>>) attributes {dimension_semantics = [#tpu.dimension_semantics<parallel>, #tpu.dimension_semantics<parallel>, #tpu.dimension_semantics<arbitrary>], iteration_bounds = array<i64: 2, 1, 1>, scalar_prefetch = 0 : i64, scratch_operands = 3 : i64, tpu.core_type = #tpu.core_type<tc>, window_params = [{transform_indices = @transform_0, window_bounds = array<i64: 1, 4, 8, 8>}, {transform_indices = @transform_1, window_bounds = array<i64: 1, 4, 8, 8>}, {transform_indices = @transform_2, window_bounds = array<i64: 1, 4, 8, 8>}, {pipeline_mode = #tpu.pipeline_mode<synchronous>, transform_indices = @transform_3, window_bounds = array<i64: 4, 8, 32>}, {transform_indices = @transform_4, window_bounds = array<i64: 1, 8, 32>}]} {
    %c0_i32 = arith.constant 0 : i32
    %0 = arith.cmpi eq, %arg2, %c0_i32 : i32
    %1 = arith.extui %0 : i1 to i32
    %c0_i32_0 = arith.constant 0 : i32
    %2 = arith.cmpi ne, %1, %c0_i32_0 : i32
    scf.if %2 {
      %cst_138 = arith.constant 0xFF800000 : f32
      %166 = vector.broadcast %cst_138 : f32 to vector<4x8x1xf32>
      %c0_139 = arith.constant 0 : index
      %c0_140 = arith.constant 0 : index
      %c0_141 = arith.constant 0 : index
      %167 = vector.load %arg9[%c0_139, %c0_140, %c0_141] : memref<4x8x1xf32, #tpu.memory_space<vmem>>, vector<4x8x1xf32>
      tpu.vector_store %arg9[%c0_139, %c0_140, %c0_141], %166 {strides = array<i32>} : memref<4x8x1xf32, #tpu.memory_space<vmem>>, vector<4x8x1xf32>,
      %cst_142 = arith.constant 0.000000e+00 : f32
      %168 = vector.broadcast %cst_142 : f32 to vector<4x8x1xf32>
      %c0_143 = arith.constant 0 : index
      %c0_144 = arith.constant 0 : index
      %c0_145 = arith.constant 0 : index
      %169 = vector.load %arg10[%c0_143, %c0_144, %c0_145] : memref<4x8x1xf32, #tpu.memory_space<vmem>>, vector<4x8x1xf32>
      tpu.vector_store %arg10[%c0_143, %c0_144, %c0_145], %168 {strides = array<i32>} : memref<4x8x1xf32, #tpu.memory_space<vmem>>, vector<4x8x1xf32>,
      %cst_146 = arith.constant 0.000000e+00 : f32
      %170 = vector.broadcast %cst_146 : f32 to vector<4x8x8xf32>
      %c0_147 = arith.constant 0 : index
      %c0_148 = arith.constant 0 : index
      %c0_149 = arith.constant 0 : index
      %171 = vector.load %arg8[%c0_147, %c0_148, %c0_149] : memref<4x8x8xf32, #tpu.memory_space<vmem>>, vector<4x8x8xf32>
      tpu.vector_store %arg8[%c0_147, %c0_148, %c0_149], %170 {strides = array<i32>} : memref<4x8x8xf32, #tpu.memory_space<vmem>>, vector<4x8x8xf32>,
    } else {
    }
    %c0 = arith.constant 0 : index
    %c0_1 = arith.constant 0 : index
    %c0_2 = arith.constant 0 : index
    %c0_3 = arith.constant 0 : index
    %3 = vector.load %arg3[%c0, %c0_1, %c0_2, %c0_3] : memref<1x4x8x8xf32, #tpu.memory_space<vmem>>, vector<1x1x8x8xf32>
    %4 = vector.shape_cast %3 : vector<1x1x8x8xf32> to vector<8x8xf32>
    %cst = arith.constant 0.353553385 : f32
    %5 = vector.broadcast %cst : f32 to vector<8x8xf32>
    %6 = arith.mulf %4, %5 : vector<8x8xf32>
    %c0_4 = arith.constant 0 : index
    %c0_5 = arith.constant 0 : index
    %c0_6 = arith.constant 0 : index
    %c0_7 = arith.constant 0 : index
    %7 = vector.load %arg4[%c0_4, %c0_5, %c0_6, %c0_7] : memref<1x4x8x8xf32, #tpu.memory_space<vmem>>, vector<1x1x8x8xf32>
    %8 = vector.shape_cast %7 : vector<1x1x8x8xf32> to vector<8x8xf32>
    %c0_8 = arith.constant 0 : index
    %c0_9 = arith.constant 0 : index
    %c0_10 = arith.constant 0 : index
    %c0_11 = arith.constant 0 : index
    %9 = vector.load %arg5[%c0_8, %c0_9, %c0_10, %c0_11] : memref<1x4x8x8xf32, #tpu.memory_space<vmem>>, vector<1x1x8x8xf32>
    %10 = vector.shape_cast %9 : vector<1x1x8x8xf32> to vector<8x8xf32>
    %cst_12 = arith.constant dense<0.000000e+00> : vector<8x8xf32>
    %11 = tpu.matmul %6, %8, %cst_12 {dimension_numbers = #tpu.dot_dimension_numbers<[1], [1], [0], [0], [0, 0, 1, 0], [], []>} : vector<8x8xf32>, vector<8x8xf32>, vector<8x8xf32> -> vector<8x8xf32>
    %c0_13 = arith.constant 0 : index
    %c0_14 = arith.constant 0 : index
    %c0_15 = arith.constant 0 : index
    %12 = vector.load %arg9[%c0_13, %c0_14, %c0_15] : memref<4x8x1xf32, #tpu.memory_space<vmem>>, vector<1x8x1xf32>
    %13 = vector.shape_cast %12 : vector<1x8x1xf32> to vector<8x1xf32>
    %c0_16 = arith.constant 0 : index
    %c0_17 = arith.constant 0 : index
    %c0_18 = arith.constant 0 : index
    %14 = vector.load %arg10[%c0_16, %c0_17, %c0_18] : memref<4x8x1xf32, #tpu.memory_space<vmem>>, vector<1x8x1xf32>
    %15 = vector.shape_cast %14 : vector<1x8x1xf32> to vector<8x1xf32>
    %cst_19 = arith.constant dense<0xFF800000> : vector<8xf32>
    %16 = vector.multi_reduction <maximumf>, %11, %cst_19 [1] : vector<8x8xf32> to vector<8xf32>
    %17 = vector.shape_cast %16 : vector<8xf32> to vector<8x1xf32>
    %18 = arith.maximumf %13, %17 : vector<8x1xf32>
    %19 = arith.subf %13, %18 : vector<8x1xf32>
    %20 = math.exp %19 : vector<8x1xf32>
    %21 = vector.broadcast %18 : vector<8x1xf32> to vector<8x8xf32>
    %22 = arith.subf %11, %21 : vector<8x8xf32>
    %23 = math.exp %22 : vector<8x8xf32>
    %24 = arith.mulf %20, %15 : vector<8x1xf32>
    %cst_20 = arith.constant dense<0.000000e+00> : vector<8xf32>
    %25 = vector.multi_reduction <add>, %23, %cst_20 [1] : vector<8x8xf32> to vector<8xf32>
    %26 = vector.shape_cast %25 : vector<8xf32> to vector<8x1xf32>
    %27 = arith.addf %24, %26 : vector<8x1xf32>
    %c0_21 = arith.constant 0 : index
    %c0_22 = arith.constant 0 : index
    %c0_23 = arith.constant 0 : index
    %28 = vector.load %arg10[%c0_21, %c0_22, %c0_23] : memref<4x8x1xf32, #tpu.memory_space<vmem>>, vector<1x8x1xf32>
    %29 = vector.shape_cast %28 : vector<1x8x1xf32> to vector<8x1xf32>
    %30 = vector.shape_cast %27 : vector<8x1xf32> to vector<1x8x1xf32>
    tpu.vector_store %arg10[%c0_21, %c0_22, %c0_23], %30 {strides = array<i32>} : memref<4x8x1xf32, #tpu.memory_space<vmem>>, vector<1x8x1xf32>,
    %c0_24 = arith.constant 0 : index
    %c0_25 = arith.constant 0 : index
    %c0_26 = arith.constant 0 : index
    %31 = vector.load %arg9[%c0_24, %c0_25, %c0_26] : memref<4x8x1xf32, #tpu.memory_space<vmem>>, vector<1x8x1xf32>
    %32 = vector.shape_cast %31 : vector<1x8x1xf32> to vector<8x1xf32>
    %33 = vector.shape_cast %18 : vector<8x1xf32> to vector<1x8x1xf32>
    tpu.vector_store %arg9[%c0_24, %c0_25, %c0_26], %33 {strides = array<i32>} : memref<4x8x1xf32, #tpu.memory_space<vmem>>, vector<1x8x1xf32>,
    %cst_27 = arith.constant dense<0.000000e+00> : vector<8x8xf32>
    %34 = tpu.matmul %23, %10, %cst_27 {dimension_numbers = #tpu.dot_dimension_numbers<[1], [0], [0], [1], [0, 0, 1, 1], [], []>} : vector<8x8xf32>, vector<8x8xf32>, vector<8x8xf32> -> vector<8x8xf32>
    %c0_28 = arith.constant 0 : index
    %c0_29 = arith.constant 0 : index
    %c0_30 = arith.constant 0 : index
    %35 = vector.load %arg8[%c0_28, %c0_29, %c0_30] : memref<4x8x8xf32, #tpu.memory_space<vmem>>, vector<1x8x8xf32>
    %36 = vector.shape_cast %35 : vector<1x8x8xf32> to vector<8x8xf32>
    %37 = vector.broadcast %20 : vector<8x1xf32> to vector<8x8xf32>
    %38 = arith.mulf %37, %36 : vector<8x8xf32>
    %39 = arith.addf %38, %34 : vector<8x8xf32>
    %c0_31 = arith.constant 0 : index
    %c0_32 = arith.constant 0 : index
    %c0_33 = arith.constant 0 : index
    %40 = vector.load %arg8[%c0_31, %c0_32, %c0_33] : memref<4x8x8xf32, #tpu.memory_space<vmem>>, vector<1x8x8xf32>
    %41 = vector.shape_cast %40 : vector<1x8x8xf32> to vector<8x8xf32>
    %42 = vector.shape_cast %39 : vector<8x8xf32> to vector<1x8x8xf32>
    tpu.vector_store %arg8[%c0_31, %c0_32, %c0_33], %42 {strides = array<i32>} : memref<4x8x8xf32, #tpu.memory_space<vmem>>, vector<1x8x8xf32>,
    %c0_34 = arith.constant 0 : index
    %c1 = arith.constant 1 : index
    %c0_35 = arith.constant 0 : index
    %c0_36 = arith.constant 0 : index
    %43 = vector.load %arg3[%c0_34, %c1, %c0_35, %c0_36] : memref<1x4x8x8xf32, #tpu.memory_space<vmem>>, vector<1x1x8x8xf32>
    %44 = vector.shape_cast %43 : vector<1x1x8x8xf32> to vector<8x8xf32>
    %cst_37 = arith.constant 0.353553385 : f32
    %45 = vector.broadcast %cst_37 : f32 to vector<8x8xf32>
    %46 = arith.mulf %44, %45 : vector<8x8xf32>
    %c0_38 = arith.constant 0 : index
    %c1_39 = arith.constant 1 : index
    %c0_40 = arith.constant 0 : index
    %c0_41 = arith.constant 0 : index
    %47 = vector.load %arg4[%c0_38, %c1_39, %c0_40, %c0_41] : memref<1x4x8x8xf32, #tpu.memory_space<vmem>>, vector<1x1x8x8xf32>
    %48 = vector.shape_cast %47 : vector<1x1x8x8xf32> to vector<8x8xf32>
    %c0_42 = arith.constant 0 : index
    %c1_43 = arith.constant 1 : index
    %c0_44 = arith.constant 0 : index
    %c0_45 = arith.constant 0 : index
    %49 = vector.load %arg5[%c0_42, %c1_43, %c0_44, %c0_45] : memref<1x4x8x8xf32, #tpu.memory_space<vmem>>, vector<1x1x8x8xf32>
    %50 = vector.shape_cast %49 : vector<1x1x8x8xf32> to vector<8x8xf32>
    %cst_46 = arith.constant dense<0.000000e+00> : vector<8x8xf32>
    %51 = tpu.matmul %46, %48, %cst_46 {dimension_numbers = #tpu.dot_dimension_numbers<[1], [1], [0], [0], [0, 0, 1, 0], [], []>} : vector<8x8xf32>, vector<8x8xf32>, vector<8x8xf32> -> vector<8x8xf32>
    %c1_47 = arith.constant 1 : index
    %c0_48 = arith.constant 0 : index
    %c0_49 = arith.constant 0 : index
    %52 = vector.load %arg9[%c1_47, %c0_48, %c0_49] : memref<4x8x1xf32, #tpu.memory_space<vmem>>, vector<1x8x1xf32>
    %53 = vector.shape_cast %52 : vector<1x8x1xf32> to vector<8x1xf32>
    %c1_50 = arith.constant 1 : index
    %c0_51 = arith.constant 0 : index
    %c0_52 = arith.constant 0 : index
    %54 = vector.load %arg10[%c1_50, %c0_51, %c0_52] : memref<4x8x1xf32, #tpu.memory_space<vmem>>, vector<1x8x1xf32>
    %55 = vector.shape_cast %54 : vector<1x8x1xf32> to vector<8x1xf32>
    %cst_53 = arith.constant dense<0xFF800000> : vector<8xf32>
    %56 = vector.multi_reduction <maximumf>, %51, %cst_53 [1] : vector<8x8xf32> to vector<8xf32>
    %57 = vector.shape_cast %56 : vector<8xf32> to vector<8x1xf32>
    %58 = arith.maximumf %53, %57 : vector<8x1xf32>
    %59 = arith.subf %53, %58 : vector<8x1xf32>
    %60 = math.exp %59 : vector<8x1xf32>
    %61 = vector.broadcast %58 : vector<8x1xf32> to vector<8x8xf32>
    %62 = arith.subf %51, %61 : vector<8x8xf32>
    %63 = math.exp %62 : vector<8x8xf32>
    %64 = arith.mulf %60, %55 : vector<8x1xf32>
    %cst_54 = arith.constant dense<0.000000e+00> : vector<8xf32>
    %65 = vector.multi_reduction <add>, %63, %cst_54 [1] : vector<8x8xf32> to vector<8xf32>
    %66 = vector.shape_cast %65 : vector<8xf32> to vector<8x1xf32>
    %67 = arith.addf %64, %66 : vector<8x1xf32>
    %c1_55 = arith.constant 1 : index
    %c0_56 = arith.constant 0 : index
    %c0_57 = arith.constant 0 : index
    %68 = vector.load %arg10[%c1_55, %c0_56, %c0_57] : memref<4x8x1xf32, #tpu.memory_space<vmem>>, vector<1x8x1xf32>
    %69 = vector.shape_cast %68 : vector<1x8x1xf32> to vector<8x1xf32>
    %70 = vector.shape_cast %67 : vector<8x1xf32> to vector<1x8x1xf32>
    tpu.vector_store %arg10[%c1_55, %c0_56, %c0_57], %70 {strides = array<i32>} : memref<4x8x1xf32, #tpu.memory_space<vmem>>, vector<1x8x1xf32>,
    %c1_58 = arith.constant 1 : index
    %c0_59 = arith.constant 0 : index
    %c0_60 = arith.constant 0 : index
    %71 = vector.load %arg9[%c1_58, %c0_59, %c0_60] : memref<4x8x1xf32, #tpu.memory_space<vmem>>, vector<1x8x1xf32>
    %72 = vector.shape_cast %71 : vector<1x8x1xf32> to vector<8x1xf32>
    %73 = vector.shape_cast %58 : vector<8x1xf32> to vector<1x8x1xf32>
    tpu.vector_store %arg9[%c1_58, %c0_59, %c0_60], %73 {strides = array<i32>} : memref<4x8x1xf32, #tpu.memory_space<vmem>>, vector<1x8x1xf32>,
    %cst_61 = arith.constant dense<0.000000e+00> : vector<8x8xf32>
    %74 = tpu.matmul %63, %50, %cst_61 {dimension_numbers = #tpu.dot_dimension_numbers<[1], [0], [0], [1], [0, 0, 1, 1], [], []>} : vector<8x8xf32>, vector<8x8xf32>, vector<8x8xf32> -> vector<8x8xf32>
    %c1_62 = arith.constant 1 : index
    %c0_63 = arith.constant 0 : index
    %c0_64 = arith.constant 0 : index
    %75 = vector.load %arg8[%c1_62, %c0_63, %c0_64] : memref<4x8x8xf32, #tpu.memory_space<vmem>>, vector<1x8x8xf32>
    %76 = vector.shape_cast %75 : vector<1x8x8xf32> to vector<8x8xf32>
    %77 = vector.broadcast %60 : vector<8x1xf32> to vector<8x8xf32>
    %78 = arith.mulf %77, %76 : vector<8x8xf32>
    %79 = arith.addf %78, %74 : vector<8x8xf32>
    %c1_65 = arith.constant 1 : index
    %c0_66 = arith.constant 0 : index
    %c0_67 = arith.constant 0 : index
    %80 = vector.load %arg8[%c1_65, %c0_66, %c0_67] : memref<4x8x8xf32, #tpu.memory_space<vmem>>, vector<1x8x8xf32>
    %81 = vector.shape_cast %80 : vector<1x8x8xf32> to vector<8x8xf32>
    %82 = vector.shape_cast %79 : vector<8x8xf32> to vector<1x8x8xf32>
    tpu.vector_store %arg8[%c1_65, %c0_66, %c0_67], %82 {strides = array<i32>} : memref<4x8x8xf32, #tpu.memory_space<vmem>>, vector<1x8x8xf32>,
    %c0_68 = arith.constant 0 : index
    %c2 = arith.constant 2 : index
    %c0_69 = arith.constant 0 : index
    %c0_70 = arith.constant 0 : index
    %83 = vector.load %arg3[%c0_68, %c2, %c0_69, %c0_70] : memref<1x4x8x8xf32, #tpu.memory_space<vmem>>, vector<1x1x8x8xf32>
    %84 = vector.shape_cast %83 : vector<1x1x8x8xf32> to vector<8x8xf32>
    %cst_71 = arith.constant 0.353553385 : f32
    %85 = vector.broadcast %cst_71 : f32 to vector<8x8xf32>
    %86 = arith.mulf %84, %85 : vector<8x8xf32>
    %c0_72 = arith.constant 0 : index
    %c2_73 = arith.constant 2 : index
    %c0_74 = arith.constant 0 : index
    %c0_75 = arith.constant 0 : index
    %87 = vector.load %arg4[%c0_72, %c2_73, %c0_74, %c0_75] : memref<1x4x8x8xf32, #tpu.memory_space<vmem>>, vector<1x1x8x8xf32>
    %88 = vector.shape_cast %87 : vector<1x1x8x8xf32> to vector<8x8xf32>
    %c0_76 = arith.constant 0 : index
    %c2_77 = arith.constant 2 : index
    %c0_78 = arith.constant 0 : index
    %c0_79 = arith.constant 0 : index
    %89 = vector.load %arg5[%c0_76, %c2_77, %c0_78, %c0_79] : memref<1x4x8x8xf32, #tpu.memory_space<vmem>>, vector<1x1x8x8xf32>
    %90 = vector.shape_cast %89 : vector<1x1x8x8xf32> to vector<8x8xf32>
    %cst_80 = arith.constant dense<0.000000e+00> : vector<8x8xf32>
    %91 = tpu.matmul %86, %88, %cst_80 {dimension_numbers = #tpu.dot_dimension_numbers<[1], [1], [0], [0], [0, 0, 1, 0], [], []>} : vector<8x8xf32>, vector<8x8xf32>, vector<8x8xf32> -> vector<8x8xf32>
    %c2_81 = arith.constant 2 : index
    %c0_82 = arith.constant 0 : index
    %c0_83 = arith.constant 0 : index
    %92 = vector.load %arg9[%c2_81, %c0_82, %c0_83] : memref<4x8x1xf32, #tpu.memory_space<vmem>>, vector<1x8x1xf32>
    %93 = vector.shape_cast %92 : vector<1x8x1xf32> to vector<8x1xf32>
    %c2_84 = arith.constant 2 : index
    %c0_85 = arith.constant 0 : index
    %c0_86 = arith.constant 0 : index
    %94 = vector.load %arg10[%c2_84, %c0_85, %c0_86] : memref<4x8x1xf32, #tpu.memory_space<vmem>>, vector<1x8x1xf32>
    %95 = vector.shape_cast %94 : vector<1x8x1xf32> to vector<8x1xf32>
    %cst_87 = arith.constant dense<0xFF800000> : vector<8xf32>
    %96 = vector.multi_reduction <maximumf>, %91, %cst_87 [1] : vector<8x8xf32> to vector<8xf32>
    %97 = vector.shape_cast %96 : vector<8xf32> to vector<8x1xf32>
    %98 = arith.maximumf %93, %97 : vector<8x1xf32>
    %99 = arith.subf %93, %98 : vector<8x1xf32>
    %100 = math.exp %99 : vector<8x1xf32>
    %101 = vector.broadcast %98 : vector<8x1xf32> to vector<8x8xf32>
    %102 = arith.subf %91, %101 : vector<8x8xf32>
    %103 = math.exp %102 : vector<8x8xf32>
    %104 = arith.mulf %100, %95 : vector<8x1xf32>
    %cst_88 = arith.constant dense<0.000000e+00> : vector<8xf32>
    %105 = vector.multi_reduction <add>, %103, %cst_88 [1] : vector<8x8xf32> to vector<8xf32>
    %106 = vector.shape_cast %105 : vector<8xf32> to vector<8x1xf32>
    %107 = arith.addf %104, %106 : vector<8x1xf32>
    %c2_89 = arith.constant 2 : index
    %c0_90 = arith.constant 0 : index
    %c0_91 = arith.constant 0 : index
    %108 = vector.load %arg10[%c2_89, %c0_90, %c0_91] : memref<4x8x1xf32, #tpu.memory_space<vmem>>, vector<1x8x1xf32>
    %109 = vector.shape_cast %108 : vector<1x8x1xf32> to vector<8x1xf32>
    %110 = vector.shape_cast %107 : vector<8x1xf32> to vector<1x8x1xf32>
    tpu.vector_store %arg10[%c2_89, %c0_90, %c0_91], %110 {strides = array<i32>} : memref<4x8x1xf32, #tpu.memory_space<vmem>>, vector<1x8x1xf32>,
    %c2_92 = arith.constant 2 : index
    %c0_93 = arith.constant 0 : index
    %c0_94 = arith.constant 0 : index
    %111 = vector.load %arg9[%c2_92, %c0_93, %c0_94] : memref<4x8x1xf32, #tpu.memory_space<vmem>>, vector<1x8x1xf32>
    %112 = vector.shape_cast %111 : vector<1x8x1xf32> to vector<8x1xf32>
    %113 = vector.shape_cast %98 : vector<8x1xf32> to vector<1x8x1xf32>
    tpu.vector_store %arg9[%c2_92, %c0_93, %c0_94], %113 {strides = array<i32>} : memref<4x8x1xf32, #tpu.memory_space<vmem>>, vector<1x8x1xf32>,
    %cst_95 = arith.constant dense<0.000000e+00> : vector<8x8xf32>
    %114 = tpu.matmul %103, %90, %cst_95 {dimension_numbers = #tpu.dot_dimension_numbers<[1], [0], [0], [1], [0, 0, 1, 1], [], []>} : vector<8x8xf32>, vector<8x8xf32>, vector<8x8xf32> -> vector<8x8xf32>
    %c2_96 = arith.constant 2 : index
    %c0_97 = arith.constant 0 : index
    %c0_98 = arith.constant 0 : index
    %115 = vector.load %arg8[%c2_96, %c0_97, %c0_98] : memref<4x8x8xf32, #tpu.memory_space<vmem>>, vector<1x8x8xf32>
    %116 = vector.shape_cast %115 : vector<1x8x8xf32> to vector<8x8xf32>
    %117 = vector.broadcast %100 : vector<8x1xf32> to vector<8x8xf32>
    %118 = arith.mulf %117, %116 : vector<8x8xf32>
    %119 = arith.addf %118, %114 : vector<8x8xf32>
    %c2_99 = arith.constant 2 : index
    %c0_100 = arith.constant 0 : index
    %c0_101 = arith.constant 0 : index
    %120 = vector.load %arg8[%c2_99, %c0_100, %c0_101] : memref<4x8x8xf32, #tpu.memory_space<vmem>>, vector<1x8x8xf32>
    %121 = vector.shape_cast %120 : vector<1x8x8xf32> to vector<8x8xf32>
    %122 = vector.shape_cast %119 : vector<8x8xf32> to vector<1x8x8xf32>
    tpu.vector_store %arg8[%c2_99, %c0_100, %c0_101], %122 {strides = array<i32>} : memref<4x8x8xf32, #tpu.memory_space<vmem>>, vector<1x8x8xf32>,
    %c0_102 = arith.constant 0 : index
    %c3 = arith.constant 3 : index
    %c0_103 = arith.constant 0 : index
    %c0_104 = arith.constant 0 : index
    %123 = vector.load %arg3[%c0_102, %c3, %c0_103, %c0_104] : memref<1x4x8x8xf32, #tpu.memory_space<vmem>>, vector<1x1x8x8xf32>
    %124 = vector.shape_cast %123 : vector<1x1x8x8xf32> to vector<8x8xf32>
    %cst_105 = arith.constant 0.353553385 : f32
    %125 = vector.broadcast %cst_105 : f32 to vector<8x8xf32>
    %126 = arith.mulf %124, %125 : vector<8x8xf32>
    %c0_106 = arith.constant 0 : index
    %c3_107 = arith.constant 3 : index
    %c0_108 = arith.constant 0 : index
    %c0_109 = arith.constant 0 : index
    %127 = vector.load %arg4[%c0_106, %c3_107, %c0_108, %c0_109] : memref<1x4x8x8xf32, #tpu.memory_space<vmem>>, vector<1x1x8x8xf32>
    %128 = vector.shape_cast %127 : vector<1x1x8x8xf32> to vector<8x8xf32>
    %c0_110 = arith.constant 0 : index
    %c3_111 = arith.constant 3 : index
    %c0_112 = arith.constant 0 : index
    %c0_113 = arith.constant 0 : index
    %129 = vector.load %arg5[%c0_110, %c3_111, %c0_112, %c0_113] : memref<1x4x8x8xf32, #tpu.memory_space<vmem>>, vector<1x1x8x8xf32>
    %130 = vector.shape_cast %129 : vector<1x1x8x8xf32> to vector<8x8xf32>
    %cst_114 = arith.constant dense<0.000000e+00> : vector<8x8xf32>
    %131 = tpu.matmul %126, %128, %cst_114 {dimension_numbers = #tpu.dot_dimension_numbers<[1], [1], [0], [0], [0, 0, 1, 0], [], []>} : vector<8x8xf32>, vector<8x8xf32>, vector<8x8xf32> -> vector<8x8xf32>
    %c3_115 = arith.constant 3 : index
    %c0_116 = arith.constant 0 : index
    %c0_117 = arith.constant 0 : index
    %132 = vector.load %arg9[%c3_115, %c0_116, %c0_117] : memref<4x8x1xf32, #tpu.memory_space<vmem>>, vector<1x8x1xf32>
    %133 = vector.shape_cast %132 : vector<1x8x1xf32> to vector<8x1xf32>
    %c3_118 = arith.constant 3 : index
    %c0_119 = arith.constant 0 : index
    %c0_120 = arith.constant 0 : index
    %134 = vector.load %arg10[%c3_118, %c0_119, %c0_120] : memref<4x8x1xf32, #tpu.memory_space<vmem>>, vector<1x8x1xf32>
    %135 = vector.shape_cast %134 : vector<1x8x1xf32> to vector<8x1xf32>
    %cst_121 = arith.constant dense<0xFF800000> : vector<8xf32>
    %136 = vector.multi_reduction <maximumf>, %131, %cst_121 [1] : vector<8x8xf32> to vector<8xf32>
    %137 = vector.shape_cast %136 : vector<8xf32> to vector<8x1xf32>
    %138 = arith.maximumf %133, %137 : vector<8x1xf32>
    %139 = arith.subf %133, %138 : vector<8x1xf32>
    %140 = math.exp %139 : vector<8x1xf32>
    %141 = vector.broadcast %138 : vector<8x1xf32> to vector<8x8xf32>
    %142 = arith.subf %131, %141 : vector<8x8xf32>
    %143 = math.exp %142 : vector<8x8xf32>
    %144 = arith.mulf %140, %135 : vector<8x1xf32>
    %cst_122 = arith.constant dense<0.000000e+00> : vector<8xf32>
    %145 = vector.multi_reduction <add>, %143, %cst_122 [1] : vector<8x8xf32> to vector<8xf32>
    %146 = vector.shape_cast %145 : vector<8xf32> to vector<8x1xf32>
    %147 = arith.addf %144, %146 : vector<8x1xf32>
    %c3_123 = arith.constant 3 : index
    %c0_124 = arith.constant 0 : index
    %c0_125 = arith.constant 0 : index
    %148 = vector.load %arg10[%c3_123, %c0_124, %c0_125] : memref<4x8x1xf32, #tpu.memory_space<vmem>>, vector<1x8x1xf32>
    %149 = vector.shape_cast %148 : vector<1x8x1xf32> to vector<8x1xf32>
    %150 = vector.shape_cast %147 : vector<8x1xf32> to vector<1x8x1xf32>
    tpu.vector_store %arg10[%c3_123, %c0_124, %c0_125], %150 {strides = array<i32>} : memref<4x8x1xf32, #tpu.memory_space<vmem>>, vector<1x8x1xf32>,
    %c3_126 = arith.constant 3 : index
    %c0_127 = arith.constant 0 : index
    %c0_128 = arith.constant 0 : index
    %151 = vector.load %arg9[%c3_126, %c0_127, %c0_128] : memref<4x8x1xf32, #tpu.memory_space<vmem>>, vector<1x8x1xf32>
    %152 = vector.shape_cast %151 : vector<1x8x1xf32> to vector<8x1xf32>
    %153 = vector.shape_cast %138 : vector<8x1xf32> to vector<1x8x1xf32>
    tpu.vector_store %arg9[%c3_126, %c0_127, %c0_128], %153 {strides = array<i32>} : memref<4x8x1xf32, #tpu.memory_space<vmem>>, vector<1x8x1xf32>,
    %cst_129 = arith.constant dense<0.000000e+00> : vector<8x8xf32>
    %154 = tpu.matmul %143, %130, %cst_129 {dimension_numbers = #tpu.dot_dimension_numbers<[1], [0], [0], [1], [0, 0, 1, 1], [], []>} : vector<8x8xf32>, vector<8x8xf32>, vector<8x8xf32> -> vector<8x8xf32>
    %c3_130 = arith.constant 3 : index
    %c0_131 = arith.constant 0 : index
    %c0_132 = arith.constant 0 : index
    %155 = vector.load %arg8[%c3_130, %c0_131, %c0_132] : memref<4x8x8xf32, #tpu.memory_space<vmem>>, vector<1x8x8xf32>
    %156 = vector.shape_cast %155 : vector<1x8x8xf32> to vector<8x8xf32>
    %157 = vector.broadcast %140 : vector<8x1xf32> to vector<8x8xf32>
    %158 = arith.mulf %157, %156 : vector<8x8xf32>
    %159 = arith.addf %158, %154 : vector<8x8xf32>
    %c3_133 = arith.constant 3 : index
    %c0_134 = arith.constant 0 : index
    %c0_135 = arith.constant 0 : index
    %160 = vector.load %arg8[%c3_133, %c0_134, %c0_135] : memref<4x8x8xf32, #tpu.memory_space<vmem>>, vector<1x8x8xf32>
    %161 = vector.shape_cast %160 : vector<1x8x8xf32> to vector<8x8xf32>
    %162 = vector.shape_cast %159 : vector<8x8xf32> to vector<1x8x8xf32>
    tpu.vector_store %arg8[%c3_133, %c0_134, %c0_135], %162 {strides = array<i32>} : memref<4x8x8xf32, #tpu.memory_space<vmem>>, vector<1x8x8xf32>,
    %c0_i32_136 = arith.constant 0 : i32
    %163 = arith.cmpi eq, %arg2, %c0_i32_136 : i32
    %164 = arith.extui %163 : i1 to i32
    %c0_i32_137 = arith.constant 0 : i32
    %165 = arith.cmpi ne, %164, %c0_i32_137 : i32
    scf.if %165 {
      %cst_138 = arith.constant 0.000000e+00 : f32
      %166 = vector.broadcast %cst_138 : f32 to vector<8x32xf32>
      %c0_139 = arith.constant 0 : index
      %c0_140 = arith.constant 0 : index
      %c0_141 = arith.constant 0 : index
      %167 = vector.load %arg10[%c0_139, %c0_140, %c0_141] : memref<4x8x1xf32, #tpu.memory_space<vmem>>, vector<1x8x1xf32>
      %168 = vector.shape_cast %167 : vector<1x8x1xf32> to vector<8x1xf32>
      %cst_142 = arith.constant 1.000000e+00 : f32
      %169 = vector.broadcast %cst_142 : f32 to vector<8x1xf32>
      %170 = arith.divf %169, %168 : vector<8x1xf32>
      %c0_143 = arith.constant 0 : index
      %c0_144 = arith.constant 0 : index
      %c0_145 = arith.constant 0 : index
      %171 = vector.load %arg8[%c0_143, %c0_144, %c0_145] : memref<4x8x8xf32, #tpu.memory_space<vmem>>, vector<1x8x8xf32>
      %172 = vector.shape_cast %171 : vector<1x8x8xf32> to vector<8x8xf32>
      %173 = vector.broadcast %170 : vector<8x1xf32> to vector<8x8xf32>
      %174 = arith.mulf %172, %173 : vector<8x8xf32>
      %c0_146 = arith.constant 0 : index
      %c0_147 = arith.constant 0 : index
      %c0_148 = arith.constant 0 : index
      %175 = vector.load %arg6[%c0_146, %c0_147, %c0_148] : memref<4x8x32xf32, #tpu.memory_space<vmem>>, vector<1x8x32xf32>
      %176 = vector.shape_cast %175 : vector<1x8x32xf32> to vector<8x32xf32>
      %cst_149 = arith.constant dense<0.000000e+00> : vector<8x32xf32>
      %177 = tpu.matmul %174, %176, %cst_149 {dimension_numbers = #tpu.dot_dimension_numbers<[1], [0], [0], [1], [0, 0, 1, 1], [], []>} : vector<8x8xf32>, vector<8x32xf32>, vector<8x32xf32> -> vector<8x32xf32>
      %178 = arith.addf %166, %177 : vector<8x32xf32>
      %c1_150 = arith.constant 1 : index
      %c0_151 = arith.constant 0 : index
      %c0_152 = arith.constant 0 : index
      %179 = vector.load %arg10[%c1_150, %c0_151, %c0_152] : memref<4x8x1xf32, #tpu.memory_space<vmem>>, vector<1x8x1xf32>
      %180 = vector.shape_cast %179 : vector<1x8x1xf32> to vector<8x1xf32>
      %cst_153 = arith.constant 1.000000e+00 : f32
      %181 = vector.broadcast %cst_153 : f32 to vector<8x1xf32>
      %182 = arith.divf %181, %180 : vector<8x1xf32>
      %c1_154 = arith.constant 1 : index
      %c0_155 = arith.constant 0 : index
      %c0_156 = arith.constant 0 : index
      %183 = vector.load %arg8[%c1_154, %c0_155, %c0_156] : memref<4x8x8xf32, #tpu.memory_space<vmem>>, vector<1x8x8xf32>
      %184 = vector.shape_cast %183 : vector<1x8x8xf32> to vector<8x8xf32>
      %185 = vector.broadcast %182 : vector<8x1xf32> to vector<8x8xf32>
      %186 = arith.mulf %184, %185 : vector<8x8xf32>
      %c1_157 = arith.constant 1 : index
      %c0_158 = arith.constant 0 : index
      %c0_159 = arith.constant 0 : index
      %187 = vector.load %arg6[%c1_157, %c0_158, %c0_159] : memref<4x8x32xf32, #tpu.memory_space<vmem>>, vector<1x8x32xf32>
      %188 = vector.shape_cast %187 : vector<1x8x32xf32> to vector<8x32xf32>
      %cst_160 = arith.constant dense<0.000000e+00> : vector<8x32xf32>
      %189 = tpu.matmul %186, %188, %cst_160 {dimension_numbers = #tpu.dot_dimension_numbers<[1], [0], [0], [1], [0, 0, 1, 1], [], []>} : vector<8x8xf32>, vector<8x32xf32>, vector<8x32xf32> -> vector<8x32xf32>
      %190 = arith.addf %178, %189 : vector<8x32xf32>
      %c2_161 = arith.constant 2 : index
      %c0_162 = arith.constant 0 : index
      %c0_163 = arith.constant 0 : index
      %191 = vector.load %arg10[%c2_161, %c0_162, %c0_163] : memref<4x8x1xf32, #tpu.memory_space<vmem>>, vector<1x8x1xf32>
      %192 = vector.shape_cast %191 : vector<1x8x1xf32> to vector<8x1xf32>
      %cst_164 = arith.constant 1.000000e+00 : f32
      %193 = vector.broadcast %cst_164 : f32 to vector<8x1xf32>
      %194 = arith.divf %193, %192 : vector<8x1xf32>
      %c2_165 = arith.constant 2 : index
      %c0_166 = arith.constant 0 : index
      %c0_167 = arith.constant 0 : index
      %195 = vector.load %arg8[%c2_165, %c0_166, %c0_167] : memref<4x8x8xf32, #tpu.memory_space<vmem>>, vector<1x8x8xf32>
      %196 = vector.shape_cast %195 : vector<1x8x8xf32> to vector<8x8xf32>
      %197 = vector.broadcast %194 : vector<8x1xf32> to vector<8x8xf32>
      %198 = arith.mulf %196, %197 : vector<8x8xf32>
      %c2_168 = arith.constant 2 : index
      %c0_169 = arith.constant 0 : index
      %c0_170 = arith.constant 0 : index
      %199 = vector.load %arg6[%c2_168, %c0_169, %c0_170] : memref<4x8x32xf32, #tpu.memory_space<vmem>>, vector<1x8x32xf32>
      %200 = vector.shape_cast %199 : vector<1x8x32xf32> to vector<8x32xf32>
      %cst_171 = arith.constant dense<0.000000e+00> : vector<8x32xf32>
      %201 = tpu.matmul %198, %200, %cst_171 {dimension_numbers = #tpu.dot_dimension_numbers<[1], [0], [0], [1], [0, 0, 1, 1], [], []>} : vector<8x8xf32>, vector<8x32xf32>, vector<8x32xf32> -> vector<8x32xf32>
      %202 = arith.addf %190, %201 : vector<8x32xf32>
      %c3_172 = arith.constant 3 : index
      %c0_173 = arith.constant 0 : index
      %c0_174 = arith.constant 0 : index
      %203 = vector.load %arg10[%c3_172, %c0_173, %c0_174] : memref<4x8x1xf32, #tpu.memory_space<vmem>>, vector<1x8x1xf32>
      %204 = vector.shape_cast %203 : vector<1x8x1xf32> to vector<8x1xf32>
      %cst_175 = arith.constant 1.000000e+00 : f32
      %205 = vector.broadcast %cst_175 : f32 to vector<8x1xf32>
      %206 = arith.divf %205, %204 : vector<8x1xf32>
      %c3_176 = arith.constant 3 : index
      %c0_177 = arith.constant 0 : index
      %c0_178 = arith.constant 0 : index
      %207 = vector.load %arg8[%c3_176, %c0_177, %c0_178] : memref<4x8x8xf32, #tpu.memory_space<vmem>>, vector<1x8x8xf32>
      %208 = vector.shape_cast %207 : vector<1x8x8xf32> to vector<8x8xf32>
      %209 = vector.broadcast %206 : vector<8x1xf32> to vector<8x8xf32>
      %210 = arith.mulf %208, %209 : vector<8x8xf32>
      %c3_179 = arith.constant 3 : index
      %c0_180 = arith.constant 0 : index
      %c0_181 = arith.constant 0 : index
      %211 = vector.load %arg6[%c3_179, %c0_180, %c0_181] : memref<4x8x32xf32, #tpu.memory_space<vmem>>, vector<1x8x32xf32>
      %212 = vector.shape_cast %211 : vector<1x8x32xf32> to vector<8x32xf32>
      %cst_182 = arith.constant dense<0.000000e+00> : vector<8x32xf32>
      %213 = tpu.matmul %210, %212, %cst_182 {dimension_numbers = #tpu.dot_dimension_numbers<[1], [0], [0], [1], [0, 0, 1, 1], [], []>} : vector<8x8xf32>, vector<8x32xf32>, vector<8x32xf32> -> vector<8x32xf32>
      %214 = arith.addf %202, %213 : vector<8x32xf32>
      %c0_183 = arith.constant 0 : index
      %c0_184 = arith.constant 0 : index
      %c0_185 = arith.constant 0 : index
      %215 = vector.load %arg7[%c0_183, %c0_184, %c0_185] : memref<1x8x32xf32, #tpu.memory_space<vmem>>, vector<1x8x32xf32>
      %216 = vector.shape_cast %215 : vector<1x8x32xf32> to vector<8x32xf32>
      %217 = vector.shape_cast %214 : vector<8x32xf32> to vector<1x8x32xf32>
      tpu.vector_store %arg7[%c0_183, %c0_184, %c0_185], %217 {strides = array<i32>} : memref<1x8x32xf32, #tpu.memory_space<vmem>>, vector<1x8x32xf32>,
    } else {
    }
    return
  }
  func.func @transform_0(%arg0: i32, %arg1: i32, %arg2: i32) -> (i32, i32, i32, i32) {
    %c0_i32 = arith.constant 0 : i32
    %c0_i32_0 = arith.constant 0 : i32
    %c0_i32_1 = arith.constant 0 : i32
    return %arg0, %c0_i32, %arg1, %c0_i32_0 : i32, i32, i32, i32
  }
  func.func @transform_1(%arg0: i32, %arg1: i32, %arg2: i32) -> (i32, i32, i32, i32) {
    %c0_i32 = arith.constant 0 : i32
    %c0_i32_0 = arith.constant 0 : i32
    %c0_i32_1 = arith.constant 0 : i32
    return %arg0, %c0_i32, %arg2, %c0_i32_0 : i32, i32, i32, i32
  }
  func.func @transform_2(%arg0: i32, %arg1: i32, %arg2: i32) -> (i32, i32, i32, i32) {
    %c0_i32 = arith.constant 0 : i32
    %c0_i32_0 = arith.constant 0 : i32
    %c0_i32_1 = arith.constant 0 : i32
    return %arg0, %c0_i32, %arg2, %c0_i32_0 : i32, i32, i32, i32
  }
  func.func @transform_3(%arg0: i32, %arg1: i32, %arg2: i32) -> (i32, i32, i32) {
    %c0_i32 = arith.constant 0 : i32
    %c0_i32_0 = arith.constant 0 : i32
    %c0_i32_1 = arith.constant 0 : i32
    %c0_i32_2 = arith.constant 0 : i32
    return %c0_i32, %c0_i32_0, %c0_i32_1 : i32, i32, i32
  }
  func.func @transform_4(%arg0: i32, %arg1: i32, %arg2: i32) -> (i32, i32, i32) {
    %c0_i32 = arith.constant 0 : i32
    %c0_i32_0 = arith.constant 0 : i32
    return %arg0, %arg1, %c0_i32 : i32, i32, i32
  }
}

</mosaic_0001>

<llo_original>
// kernel: tpu_custom_call.1
$region0: #{tpu_custom_call.1}
  #allocation0 [shape = 'u32[]', space=smem, size = 0x4, offset = 0x4, fixed_abs, tag = 'smem constant byte address 0x4 - core index']
  #allocation1 [shape = 'u32[144,128]{1,0:T(1,128)}', space=vmem, size = 0x12000, scoped, tag = 'internal scratch']
  #allocation2 [shape = 'f32[4,8,8]{2,1,0:T(8,128)}', space=vmem, size = 0x4000, scoped, tag = 'scratch operand']
  #allocation3 [shape = 'f32[4,8,1]{2,1,0:T(8,128)}', space=vmem, size = 0x4000, scoped, tag = 'scratch operand']
  #allocation4 [shape = 'f32[4,8,1]{2,1,0:T(8,128)}', space=vmem, size = 0x4000, scoped, tag = 'scratch operand']
  %s0 = inlined_call_operand.hbm [shape: f32[2,4,8,8], index: 0, kind: input, shape index: {}]
  %s1 = inlined_call_operand.hbm [shape: f32[2,4,8,8], index: 1, kind: input, shape index: {}]
  %s2 = inlined_call_operand.hbm [shape: f32[2,4,8,8], index: 2, kind: input, shape index: {}]
  %s3 = inlined_call_operand.hbm [shape: f32[4,8,32], index: 3, kind: input, shape index: {}]
  %s4 = inlined_call_operand.hbm [shape: f32[2,8,32], index: 4, kind: output, shape index: {}]
  %s5 = sld [smem:[#allocation0]]
  $region73: #{tpu_custom_call.1} parent=0
    _
  %s7 = ssub.s32 1, %s5
  %s8 = scalar_select 0, %s7, %s5
  $region1: #{tpu_custom_call.1} parent=0
    #allocation5 [shape = 'u8[32768]{0}', space=vmem, size = 0x8000, scoped, tag = 'input window, operand 0']
    #allocation6 [shape = 's32[2]{0}', space=sflag, size = 0x8, scoped, tag = 'scoped memory for tpu_custom_call.1']
    #allocation7 [shape = 's32[2]{0}', space=sflag, size = 0x8, scoped, tag = 'scoped memory for tpu_custom_call.1']
    #allocation8 [shape = 'u8[32768]{0}', space=vmem, size = 0x8000, scoped, tag = 'input window, operand 1']
    #allocation9 [shape = 's32[2]{0}', space=sflag, size = 0x8, scoped, tag = 'scoped memory for tpu_custom_call.1']
    #allocation10 [shape = 'u8[32768]{0}', space=vmem, size = 0x8000, scoped, tag = 'input window, operand 2']
    #allocation11 [shape = 'u8[16384]{0}', space=vmem, size = 0x4000, scoped, tag = 'input window, operand 3, single buffered']
    #allocation12 [shape = 's32[1]{0}', space=sflag, size = 0x4, scoped, tag = 'scoped memory for tpu_custom_call.1']
    #allocation13 [shape = 'u8[8192]{0}', space=vmem, size = 0x2000, scoped, tag = 'output window, operand 0']
    %9 = vsyncpa [#allocation6], 0
    %s10 = scalar_lea.sflag [#allocation6], 1
    %11 = vsyncpa %s10, 0
    %12 = vsyncpa [#allocation9], 0
    %s13 = scalar_lea.sflag [#allocation9], 1
    %14 = vsyncpa %s13, 0
    %15 = vsyncpa [#allocation12], 0
    %16 = vsyncpa [#allocation7], 0
    %s17 = scalar_lea.sflag [#allocation7], 1
    %18 = vsyncpa %s17, 0
    loop: start=0, step=1, limit=4
    $region2: #{tpu_custom_call.1} parent=1 // loop_pre_header
      _
    $region3: #{tpu_custom_call.1} parent=1 // loop_header
      %s20 = sphi 0, %s24
      %p21 = scmp.ge.s32.totalorder %s20, 4
      %s27 = sphi 0, %s46
      %s28 = sphi 0, %s42
      %s29 = sphi 0, %s38
      %s30 = sphi 0, %s27
      %s31 = sphi 0, %s28
      %s32 = sphi 0, %s29
      %s33 = sphi 0, %s30
      %s34 = sphi 0, %s31
      %s35 = sphi 0, %s32
      %s51 = sphi 0, %s53
      %s54 = sphi 0, %s51
      %s55 = sphi 0, %s54
      %s71 = sphi 0, %s55
      %s79 = sphi 0, %s81
      %s82 = sphi 0, %s79
      %s83 = sphi 0, %s82
      %s99 = sphi 0, %s83
      %s107 = sphi 0, %s109
      %s110 = sphi 0, %s107
      %s111 = sphi 0, %s110
      %s127 = sphi 0, %s111
      %s131 = sphi 0, %s131
      %s133 = sphi 0, %s131
      %s134 = sphi 0, %s133
      %s148 = sphi 0, %s134
      %s156 = sphi 0, %s158
      %s159 = sphi 0, %s156
      %s160 = sphi 0, %s159
      %s176 = sphi 0, %s160
    $region4: #{tpu_custom_call.1} parent=1 // loop_header_branch
      %23 = sbr.rel (%p21) target = $region8
    $region5: #{tpu_custom_call.1} parent=1 // loop_body
      %s25 = ssub.s32 %s20, 1
      %s26 = ssub.s32 %s20, 2
      %s36 = sadd.s32 1, %s29
      %p37 = scmp.ge.s32.totalorder %s36, 1
      %s38 = scalar_select %p37, 0, %s36
      %s39 = sadd.s32 1, %s28
      %s40 = scalar_select %p37, %s39, %s28
      %p41 = scmp.ge.s32.totalorder %s40, 1
      %s42 = scalar_select %p41, 0, %s40
      %s43 = sadd.s32 1, %s27
      %s44 = scalar_select %p41, %s43, %s27
      %p45 = scmp.ge.s32.totalorder %s44, 2
      %s46 = scalar_select %p45, 0, %s44
      %s47 = ssub.s32 %s27, %s46
      %s48 = ssub.s32 %s28, %s42
      %s49 = sor.u32 %s47, %s48
      %p50 = scmp.eq.s32.totalorder %s49, 0
      %s52 = sadd.s32 %s51, 1
      %s53 = scalar_select %p50, %s51, %s52
      %p56 = pneg %p50
      %p57 = scmp.eq.s32.totalorder %s20, 1
      %p58 = por %p56, %p57
      %p59 = scmp.ne.s32.totalorder %s51, %s54
      %p60 = scmp.eq.s32.totalorder %s20, 0
      %p61 = por %p59, %p60
      %p62 = scmp.ne.s32.totalorder %s51, %s54
      %p63 = scmp.eq.s32.totalorder %s25, 1
      %p64 = por %p62, %p63
      %p65 = scmp.ne.s32.totalorder %s54, %s55
      %p66 = scmp.eq.s32.totalorder %s25, 0
      %p67 = por %p65, %p66
      %p68 = scmp.ne.s32.totalorder %s54, %s55
      %p69 = scmp.eq.s32.totalorder %s26, 1
      %p70 = por %p68, %p69
      %p72 = scmp.ne.s32.totalorder %s55, %s71
      %p73 = scmp.eq.s32.totalorder %s26, 0
      %p74 = por %p72, %p73
      %s75 = ssub.s32 %s27, %s46
      %s76 = ssub.s32 %s29, %s38
      %s77 = sor.u32 %s75, %s76
      %p78 = scmp.eq.s32.totalorder %s77, 0
      %s80 = sadd.s32 %s79, 1
      %s81 = scalar_select %p78, %s79, %s80
      %p84 = pneg %p78
      %p85 = scmp.eq.s32.totalorder %s20, 1
      %p86 = por %p84, %p85
      %p87 = scmp.ne.s32.totalorder %s79, %s82
      %p88 = scmp.eq.s32.totalorder %s20, 0
      %p89 = por %p87, %p88
      %p90 = scmp.ne.s32.totalorder %s79, %s82
      %p91 = scmp.eq.s32.totalorder %s25, 1
      %p92 = por %p90, %p91
      %p93 = scmp.ne.s32.totalorder %s82, %s83
      %p94 = scmp.eq.s32.totalorder %s25, 0
      %p95 = por %p93, %p94
      %p96 = scmp.ne.s32.totalorder %s82, %s83
      %p97 = scmp.eq.s32.totalorder %s26, 1
      %p98 = por %p96, %p97
      %p100 = scmp.ne.s32.totalorder %s83, %s99
      %p101 = scmp.eq.s32.totalorder %s26, 0
      %p102 = por %p100, %p101
      %s103 = ssub.s32 %s27, %s46
      %s104 = ssub.s32 %s29, %s38
      %s105 = sor.u32 %s103, %s104
      %p106 = scmp.eq.s32.totalorder %s105, 0
      %s108 = sadd.s32 %s107, 1
      %s109 = scalar_select %p106, %s107, %s108
      %p112 = pneg %p106
      %p113 = scmp.eq.s32.totalorder %s20, 1
      %p114 = por %p112, %p113
      %p115 = scmp.ne.s32.totalorder %s107, %s110
      %p116 = scmp.eq.s32.totalorder %s20, 0
      %p117 = por %p115, %p116
      %p118 = scmp.ne.s32.totalorder %s107, %s110
      %p119 = scmp.eq.s32.totalorder %s25, 1
      %p120 = por %p118, %p119
      %p121 = scmp.ne.s32.totalorder %s110, %s111
      %p122 = scmp.eq.s32.totalorder %s25, 0
      %p123 = por %p121, %p122
      %p124 = scmp.ne.s32.totalorder %s110, %s111
      %p125 = scmp.eq.s32.totalorder %s26, 1
      %p126 = por %p124, %p125
      %p128 = scmp.ne.s32.totalorder %s111, %s127
      %p129 = scmp.eq.s32.totalorder %s26, 0
      %p130 = por %p128, %p129
      %s132 = sadd.s32 %s131, 1
      %p135 = scmp.eq.s32.totalorder %s20, 1
      %p136 = scmp.ne.s32.totalorder %s131, %s133
      %p137 = scmp.eq.s32.totalorder %s20, 0
      %p138 = por %p136, %p137
      %p139 = scmp.ne.s32.totalorder %s131, %s133
      %p140 = scmp.eq.s32.totalorder %s25, 1
      %p141 = por %p139, %p140
      %p142 = scmp.ne.s32.totalorder %s133, %s134
      %p143 = scmp.eq.s32.totalorder %s25, 0
      %p144 = por %p142, %p143
      %p145 = scmp.ne.s32.totalorder %s133, %s134
      %p146 = scmp.eq.s32.totalorder %s26, 1
      %p147 = por %p145, %p146
      %p149 = scmp.ne.s32.totalorder %s134, %s148
      %p150 = scmp.eq.s32.totalorder %s26, 0
      %p151 = por %p149, %p150
      %s152 = ssub.s32 %s27, %s46
      %s153 = ssub.s32 %s28, %s42
      %s154 = sor.u32 %s152, %s153
      %p155 = scmp.eq.s32.totalorder %s154, 0
      %s157 = sadd.s32 %s156, 1
      %s158 = scalar_select %p155, %s156, %s157
      %p161 = pneg %p155
      %p162 = scmp.eq.s32.totalorder %s20, 1
      %p163 = por %p161, %p162
      %p164 = scmp.ne.s32.totalorder %s156, %s159
      %p165 = scmp.eq.s32.totalorder %s20, 0
      %p166 = por %p164, %p165
      %p167 = scmp.ne.s32.totalorder %s156, %s159
      %p168 = scmp.eq.s32.totalorder %s25, 1
      %p169 = por %p167, %p168
      %p170 = scmp.ne.s32.totalorder %s159, %s160
      %p171 = scmp.eq.s32.totalorder %s25, 0
      %p172 = por %p170, %p171
      %p173 = scmp.ne.s32.totalorder %s159, %s160
      %p174 = scmp.eq.s32.totalorder %s26, 1
      %p175 = por %p173, %p174
      %p177 = scmp.ne.s32.totalorder %s160, %s176
      %p178 = scmp.eq.s32.totalorder %s26, 0
      %p179 = por %p177, %p178
      %p180 = scmp.le.s32.totalorder 1, %s20
      %p181 = scmp.lt.s32.totalorder %s20, 3
      %p182 = pnand %p180, %p181
      %p183 = pneg %p182
      // Predicated region
      $region9: #{tpu_custom_call.1} parent=5 // pred_check
        _
      $region10: #{tpu_custom_call.1} parent=5 // pred_check_branch
        %185 = sbr.rel (%p182) target = $region12
      $region11: #{tpu_custom_call.1} parent=5 // pred_region
        %s186 = ssub.s32 %s20, 1
        // Predicated region
        $region13: #{tpu_custom_call.1} parent=11 // pred_check
          %p187 = pneg %p144
        $region14: #{tpu_custom_call.1} parent=11 // pred_check_branch
          %189 = sbr.rel (%p187) target = $region16
        $region15: #{tpu_custom_call.1} parent=11 // pred_region
          %s191 = ssub.s32 512, 512
          %192 = vsyncadd [#allocation12], %s191
          %s193 = sshll.u32 [#allocation11], 4
          %s194 = int_to_ptr.vmem [resolvable:$true] %s193
          %199 = dma.hbm_to_vmem [thread:$0]  %s3, 512, %s194, [#allocation12], 128, 128, 8
        $region16: #{tpu_custom_call.1} parent=11 // pred_fallthru
          _
      $region12: #{tpu_custom_call.1} parent=5 // pred_fallthru
        _
      %p200 = scmp.lt.s32.totalorder %s20, 2
      // Predicated region
      $region17: #{tpu_custom_call.1} parent=5 // pred_check
        %p201 = pneg %p200
      $region18: #{tpu_custom_call.1} parent=5 // pred_check_branch
        %203 = sbr.rel (%p201) target = $region20
      $region19: #{tpu_custom_call.1} parent=5 // pred_region
        // Predicated region
        $region21: #{tpu_custom_call.1} parent=19 // pred_check
          %p204 = pneg %p61
        $region22: #{tpu_custom_call.1} parent=19 // pred_check_branch
          %206 = sbr.rel (%p204) target = $region24
        $region23: #{tpu_custom_call.1} parent=19 // pred_region
          %s207 = sand.u32 %s51, 1
          %s208 = scalar_lea.sflag [#allocation6], %s207
          %s209 = sand.u32 %s51, 1
          %s210 = smul.addr %s209, 32
          %s211 = scalar_lea.vmem [#allocation5], %s210
          %s213 = ssub.s32 512, 512
          %214 = vsyncadd %s208, %s213
          %s215 = smul.addr %s27, 4
          %s216 = sadd.s32 %s28, %s215
          %s217 = smul.addr %s216, 128
          %s218 = scalar_lea.hbm %s0, %s217
          %s219 = sshll.u32 %s211, 4
          %s220 = int_to_ptr.vmem [resolvable:$true] %s219
          %225 = dma.hbm_to_vmem [thread:$0]  %s218, 512, %s220, %s208, 128, 128, 8
        $region24: #{tpu_custom_call.1} parent=19 // pred_fallthru
          _
        // Predicated region
        $region25: #{tpu_custom_call.1} parent=19 // pred_check
          %p226 = pneg %p89
        $region26: #{tpu_custom_call.1} parent=19 // pred_check_branch
          %228 = sbr.rel (%p226) target = $region28
        $region27: #{tpu_custom_call.1} parent=19 // pred_region
          %s229 = sand.u32 %s20, 1
          %s230 = scalar_lea.sflag [#allocation9], %s229
          %s231 = sand.u32 %s79, 1
          %s232 = smul.addr %s231, 32
          %s233 = scalar_lea.vmem [#allocation8], %s232
          %s235 = ssub.s32 512, 512
          %236 = vsyncadd %s230, %s235
          %s237 = smul.addr %s27, 4
          %s238 = sadd.s32 %s29, %s237
          %s239 = smul.addr %s238, 128
          %s240 = scalar_lea.hbm %s1, %s239
          %s241 = sshll.u32 %s233, 4
          %s242 = int_to_ptr.vmem [resolvable:$true] %s241
          %247 = dma.hbm_to_vmem [thread:$0]  %s240, 512, %s242, %s230, 128, 128, 8
        $region28: #{tpu_custom_call.1} parent=19 // pred_fallthru
          _
        // Predicated region
        $region29: #{tpu_custom_call.1} parent=19 // pred_check
          %p248 = pneg %p117
        $region30: #{tpu_custom_call.1} parent=19 // pred_check_branch
          %250 = sbr.rel (%p248) target = $region32
        $region31: #{tpu_custom_call.1} parent=19 // pred_region
          %s251 = sand.u32 %s20, 1
          %s252 = scalar_lea.sflag [#allocation9], %s251
          %s253 = sand.u32 %s107, 1
          %s254 = smul.addr %s253, 32
          %s255 = scalar_lea.vmem [#allocation10], %s254
          %s257 = ssub.s32 512, 512
          %258 = vsyncadd %s252, %s257
          %s259 = smul.addr %s27, 4
          %s260 = sadd.s32 %s29, %s259
          %s261 = smul.addr %s260, 128
          %s262 = scalar_lea.hbm %s2, %s261
          %s263 = sshll.u32 %s255, 4
          %s264 = int_to_ptr.vmem [resolvable:$true] %s263
          %269 = dma.hbm_to_vmem [thread:$0]  %s262, 512, %s264, %s252, 128, 128, 8
        $region32: #{tpu_custom_call.1} parent=19 // pred_fallthru
          _
      $region20: #{tpu_custom_call.1} parent=5 // pred_fallthru
        _
      %p270 = scmp.le.s32.totalorder 1, %s20
      %p271 = scmp.lt.s32.totalorder %s20, 3
      %p272 = pnand %p270, %p271
      %p273 = pneg %p272
      // Predicated region
      $region33: #{tpu_custom_call.1} parent=5 // pred_check
        _
      $region34: #{tpu_custom_call.1} parent=5 // pred_check_branch
        %275 = sbr.rel (%p272) target = $region36
      $region35: #{tpu_custom_call.1} parent=5 // pred_region
        %s276 = ssub.s32 %s20, 1
        %s277 = sand.u32 %s54, 1
        %s278 = scalar_lea.sflag [#allocation6], %s277
        %s279 = sand.u32 %s54, 1
        %s280 = smul.addr %s279, 32
        %s281 = scalar_lea.vmem [#allocation5], %s280
        // Predicated region
        $region37: #{tpu_custom_call.1} parent=35 // pred_check
          %p282 = pneg %p67
        $region38: #{tpu_custom_call.1} parent=35 // pred_check_branch
          %284 = sbr.rel (%p282) target = $region40
        $region39: #{tpu_custom_call.1} parent=35 // pred_region
          %285 = dma.done %s278, 512
        $region40: #{tpu_custom_call.1} parent=35 // pred_fallthru
          _
        %s286 = sand.u32 %s25, 1
        %s287 = scalar_lea.sflag [#allocation9], %s286
        %s288 = sand.u32 %s82, 1
        %s289 = smul.addr %s288, 32
        %s290 = scalar_lea.vmem [#allocation8], %s289
        // Predicated region
        $region41: #{tpu_custom_call.1} parent=35 // pred_check
          %p291 = pneg %p95
        $region42: #{tpu_custom_call.1} parent=35 // pred_check_branch
          %293 = sbr.rel (%p291) target = $region44
        $region43: #{tpu_custom_call.1} parent=35 // pred_region
          %294 = dma.done %s287, 512
        $region44: #{tpu_custom_call.1} parent=35 // pred_fallthru
          _
        %s295 = sand.u32 %s25, 1
        %s296 = scalar_lea.sflag [#allocation9], %s295
        %s297 = sand.u32 %s110, 1
        %s298 = smul.addr %s297, 32
        %s299 = scalar_lea.vmem [#allocation10], %s298
        // Predicated region
        $region45: #{tpu_custom_call.1} parent=35 // pred_check
          %p300 = pneg %p123
        $region46: #{tpu_custom_call.1} parent=35 // pred_check_branch
          %302 = sbr.rel (%p300) target = $region48
        $region47: #{tpu_custom_call.1} parent=35 // pred_region
          %303 = dma.done %s296, 512
        $region48: #{tpu_custom_call.1} parent=35 // pred_fallthru
          _
        // Predicated region
        $region49: #{tpu_custom_call.1} parent=35 // pred_check
          %p304 = pneg %p144
        $region50: #{tpu_custom_call.1} parent=35 // pred_check_branch
          %306 = sbr.rel (%p304) target = $region52
        $region51: #{tpu_custom_call.1} parent=35 // pred_region
          %307 = dma.done [#allocation12], 512
        $region52: #{tpu_custom_call.1} parent=35 // pred_fallthru
          _
        %s308 = sand.u32 %s54, 1
        %s309 = scalar_lea.sflag [#allocation6], %s308
        %s310 = sand.u32 %s54, 1
        %s311 = smul.addr %s310, 32
        %s312 = scalar_lea.vmem [#allocation5], %s311
        %p313 = pneg %p67
        %p314 = pneg %p64
        %s315 = sand.u32 %s25, 1
        %s316 = scalar_lea.sflag [#allocation9], %s315
        %s317 = sand.u32 %s82, 1
        %s318 = smul.addr %s317, 32
        %s319 = scalar_lea.vmem [#allocation8], %s318
        %p320 = pneg %p95
        %p321 = pneg %p92
        %s322 = sand.u32 %s25, 1
        %s323 = scalar_lea.sflag [#allocation9], %s322
        %s324 = sand.u32 %s110, 1
        %s325 = smul.addr %s324, 32
        %s326 = scalar_lea.vmem [#allocation10], %s325
        %p327 = pneg %p123
        %p328 = pneg %p120
        %p329 = pneg %p144
        %p330 = pneg %p141
        %p331 = pneg %p172
        %p332 = pneg %p169
        %s333 = sand.u32 %s159, 1
        %s334 = scalar_lea.sflag [#allocation7], %s333
        %s335 = sand.u32 %s159, 1
        %s336 = smul.addr %s335, 8
        %s337 = scalar_lea.vmem [#allocation13], %s336
        %p338 = scmp.eq.s32.totalorder %s32, 0
        // Predicated region
        $region53: #{tpu_custom_call.1} parent=35 // pred_check
          %p339 = pneg %p338
        $region54: #{tpu_custom_call.1} parent=35 // pred_check_branch
          %341 = sbr.rel (%p339) target = $region56
        $region55: #{tpu_custom_call.1} parent=35 // pred_region
          %vm342 = vcmask 7168
          %343 = vst.msk [vmem:[#allocation3] sm:$0xff] %vm342, -inf
          %344 = vst.msk [vmem:[#allocation3 + $0x8] sm:$0xff] %vm342, -inf
          %345 = vst.msk [vmem:[#allocation3 + $0x10] sm:$0xff] %vm342, -inf
          %346 = vst.msk [vmem:[#allocation3 + $0x18] sm:$0xff] %vm342, -inf
          %347 = vst.msk [vmem:[#allocation4] sm:$0xff] %vm342, 0.0
          %348 = vst.msk [vmem:[#allocation4 + $0x8] sm:$0xff] %vm342, 0.0
          %349 = vst.msk [vmem:[#allocation4 + $0x10] sm:$0xff] %vm342, 0.0
          %350 = vst.msk [vmem:[#allocation4 + $0x18] sm:$0xff] %vm342, 0.0
          %vm351 = vcmask 64512
          %352 = vst.msk [vmem:[#allocation2] sm:$0xff] %vm351, 0.0
          %353 = vst.msk [vmem:[#allocation2 + $0x8] sm:$0xff] %vm351, 0.0
          %354 = vst.msk [vmem:[#allocation2 + $0x10] sm:$0xff] %vm351, 0.0
          %355 = vst.msk [vmem:[#allocation2 + $0x18] sm:$0xff] %vm351, 0.0
        $region56: #{tpu_custom_call.1} parent=35 // pred_fallthru
          _
        %v356 = vld [vmem:[%s281] sm:$0xff]
        %v357 = vmul.f32 %v356, 0.35355338
        %v358 = vld [vmem:[%s290] sm:$0xff]
        %v359 = vld [vmem:[%s299] sm:$0xff]
        %vm360 = vcmask 64512
        %v362 = vsel %vm360, %v357, 0
        %v365 = vsel %vm360, %v358, 0
        %367 = vmatprep.subr.mxu0 0.0
        %368 = vmatpush1.xpose.msra.mxu0 %v365
        %369 = vmatprep.subr.mxu0 0.0
        %370 = vmatpush1.xpose.msra.mxu0 0.0
        %371 = vmatprep.subr.mxu0 0.0
        %372 = vmatpush1.xpose.msra.mxu0 0.0
        %373 = vmatprep.subr.mxu0 0.0
        %374 = vmatpush1.xpose.msra.mxu0 0.0
        %375 = vmatprep.subr.mxu0 0.0
        %376 = vmatpush1.xpose.msra.mxu0 0.0
        %377 = vmatprep.subr.mxu0 0.0
        %378 = vmatpush1.xpose.msra.mxu0 0.0
        %379 = vmatprep.subr.mxu0 0.0
        %380 = vmatpush1.xpose.msra.mxu0 0.0
        %381 = vmatprep.subr.mxu0 0.0
        %382 = vmatpush1.xpose.msra.mxu0 0.0
        %383 = vmatprep.subr.mxu0 0.0
        %384 = vmatpush1.xpose.msra.mxu0 0.0
        %385 = vmatprep.subr.mxu0 0.0
        %386 = vmatpush1.xpose.msra.mxu0 0.0
        %387 = vmatprep.subr.mxu0 0.0
        %388 = vmatpush1.xpose.msra.mxu0 0.0
        %389 = vmatprep.subr.mxu0 0.0
        %390 = vmatpush1.xpose.msra.mxu0 0.0
        %391 = vmatprep.subr.mxu0 0.0
        %392 = vmatpush1.xpose.msra.mxu0 0.0
        %393 = vmatprep.subr.mxu0 0.0
        %394 = vmatpush1.xpose.msra.mxu0 0.0
        %395 = vmatprep.subr.mxu0 0.0
        %396 = vmatpush1.xpose.msra.mxu0 0.0
        %397 = vmatprep.subr.mxu0 0.0
        %398 = vmatpush1.xpose.msra.mxu0 0.0
        %399 = vmatprep.subr.mxu0 0.0
        %400 = vmatpush1.xpose.msra.mxu0 0.0
        %401 = vmatprep.subr.mxu0 0.0
        %402 = vmatpush1.xpose.msra.mxu0 0.0
        %403 = vmatprep.subr.mxu0 0.0
        %404 = vmatpush1.xpose.msra.mxu0 0.0
        %405 = vmatprep.subr.mxu0 0.0
        %406 = vmatpush1.xpose.msra.mxu0 0.0
        %407 = vmatprep.subr.mxu0 0.0
        %408 = vmatpush1.xpose.msra.mxu0 0.0
        %409 = vmatprep.subr.mxu0 0.0
        %410 = vmatpush1.xpose.msra.mxu0 0.0
        %411 = vmatprep.subr.mxu0 0.0
        %412 = vmatpush1.xpose.msra.mxu0 0.0
        %413 = vmatprep.subr.mxu0 0.0
        %414 = vmatpush1.xpose.msra.mxu0 0.0
        %415 = vmatprep.subr.mxu0 0.0
        %416 = vmatpush1.xpose.msra.mxu0 0.0
        %417 = vmatprep.subr.mxu0 0.0
        %418 = vmatpush1.xpose.msra.mxu0 0.0
        %419 = vmatprep.subr.mxu0 0.0
        %420 = vmatpush1.xpose.msra.mxu0 0.0
        %421 = vmatprep.subr.mxu0 0.0
        %422 = vmatpush1.xpose.msra.mxu0 0.0
        %423 = vmatprep.subr.mxu0 0.0
        %424 = vmatpush1.xpose.msra.mxu0 0.0
        %425 = vmatprep.subr.mxu0 0.0
        %426 = vmatpush1.xpose.msra.mxu0 0.0
        %427 = vmatprep.subr.mxu0 0.0
        %428 = vmatpush1.xpose.msra.mxu0 0.0
        %429 = vmatprep.subr.mxu0 0.0
        %430 = vmatpush1.xpose.msra.mxu0 0.0
        %431 = vmatprep.mubr.f32.mxu0 0.0
        %432 = vmatmul.mubr.f32.gmra.mrb[0].mxu0 %v362
        %v433 = vpop.f32.mrb[0].mxu0
        %v434 = vadd.f32 0.0, %v433
        %v435 = vpop.f32.mrb[0].mxu0
        %436 = vdwg.mxu0
        %v437 = vld [vmem:[#allocation3] sm:$0xff]
        %v438 = vld [vmem:[#allocation4] sm:$0xff]
        %v439 = vsel %vm360, %v434, -inf
        %440 = vmax.xlane.f32.xlu0 %v439
        %v441 = vpop.xlane.xlu0 %440
        %v442 = vmax.f32 %v437, %v441
        %v443 = vsub.f32 %v437, %v442
        %v444 = vmul.f32 %v443, 1.442695
        %v445 = vpow.pop %v444
        %447 = vset.pattern.permute.xlu0 0
        %448 = vperm.xlu0 %447, %v442
        %v449 = vpop.permute.xlu0 %448
        %v451 = vsub.f32 %v434, %v449
        %v452 = vmul.f32 %v451, 1.442695
        %v453 = vpow.pop %v452
        %v454 = vmul.f32 %v445, %v438
        %v455 = vsel %vm360, %v453, 0.0
        %456 = vadd.xlane.f32.xlu0 %v455
        %v457 = vpop.xlane.xlu0 %456
        %v458 = vadd.f32 %v454, %v457
        %vm459 = vcmask 7168
        %460 = vst.msk [vmem:[#allocation4] sm:$0xff] %vm459, %v458
        %461 = vst.msk [vmem:[#allocation3] sm:$0xff] %vm459, %v442
        %v463 = vsel %vm360, %v453, 0
        %465 = vmatprep.subr.mxu0 0.0
        %466 = vmatpush1.msra.mxu0 %v359
        %467 = vmatprep.subr.mxu0 0.0
        %468 = vmatpush1.msra.mxu0 0.0
        %469 = vmatprep.subr.mxu0 0.0
        %470 = vmatpush1.msra.mxu0 0.0
        %471 = vmatprep.subr.mxu0 0.0
        %472 = vmatpush1.msra.mxu0 0.0
        %473 = vmatprep.subr.mxu0 0.0
        %474 = vmatpush1.msra.mxu0 0.0
        %475 = vmatprep.subr.mxu0 0.0
        %476 = vmatpush1.msra.mxu0 0.0
        %477 = vmatprep.subr.mxu0 0.0
        %478 = vmatpush1.msra.mxu0 0.0
        %479 = vmatprep.subr.mxu0 0.0
        %480 = vmatpush1.msra.mxu0 0.0
        %481 = vmatprep.subr.mxu0 0.0
        %482 = vmatpush1.msra.mxu0 0.0
        %483 = vmatprep.subr.mxu0 0.0
        %484 = vmatpush1.msra.mxu0 0.0
        %485 = vmatprep.subr.mxu0 0.0
        %486 = vmatpush1.msra.mxu0 0.0
        %487 = vmatprep.subr.mxu0 0.0
        %488 = vmatpush1.msra.mxu0 0.0
        %489 = vmatprep.subr.mxu0 0.0
        %490 = vmatpush1.msra.mxu0 0.0
        %491 = vmatprep.subr.mxu0 0.0
        %492 = vmatpush1.msra.mxu0 0.0
        %493 = vmatprep.subr.mxu0 0.0
        %494 = vmatpush1.msra.mxu0 0.0
        %495 = vmatprep.subr.mxu0 0.0
        %496 = vmatpush1.msra.mxu0 0.0
        %497 = vmatprep.subr.mxu0 0.0
        %498 = vmatpush1.msra.mxu0 0.0
        %499 = vmatprep.subr.mxu0 0.0
        %500 = vmatpush1.msra.mxu0 0.0
        %501 = vmatprep.subr.mxu0 0.0
        %502 = vmatpush1.msra.mxu0 0.0
        %503 = vmatprep.subr.mxu0 0.0
        %504 = vmatpush1.msra.mxu0 0.0
        %505 = vmatprep.subr.mxu0 0.0
        %506 = vmatpush1.msra.mxu0 0.0
        %507 = vmatprep.subr.mxu0 0.0
        %508 = vmatpush1.msra.mxu0 0.0
        %509 = vmatprep.subr.mxu0 0.0
        %510 = vmatpush1.msra.mxu0 0.0
        %511 = vmatprep.subr.mxu0 0.0
        %512 = vmatpush1.msra.mxu0 0.0
        %513 = vmatprep.subr.mxu0 0.0
        %514 = vmatpush1.msra.mxu0 0.0
        %515 = vmatprep.subr.mxu0 0.0
        %516 = vmatpush1.msra.mxu0 0.0
        %517 = vmatprep.subr.mxu0 0.0
        %518 = vmatpush1.msra.mxu0 0.0
        %519 = vmatprep.subr.mxu0 0.0
        %520 = vmatpush1.msra.mxu0 0.0
        %521 = vmatprep.subr.mxu0 0.0
        %522 = vmatpush1.msra.mxu0 0.0
        %523 = vmatprep.subr.mxu0 0.0
        %524 = vmatpush1.msra.mxu0 0.0
        %525 = vmatprep.subr.mxu0 0.0
        %526 = vmatpush1.msra.mxu0 0.0
        %527 = vmatprep.subr.mxu0 0.0
        %528 = vmatpush1.msra.mxu0 0.0
        %529 = vmatprep.mubr.f32.mxu0 0.0
        %530 = vmatmul.mubr.f32.gmra.mrb[0].mxu0 %v463
        %v531 = vpop.f32.mrb[0].mxu0
        %v532 = vadd.f32 0.0, %v531
        %v533 = vpop.f32.mrb[0].mxu0
        %534 = vdwg.mxu0
        %v535 = vld [vmem:[#allocation2] sm:$0xff]
        %537 = vset.pattern.permute.xlu0 0
        %538 = vperm.xlu0 %537, %v445
        %v539 = vpop.permute.xlu0 %538
        %v541 = vmul.f32 %v539, %v535
        %v542 = vadd.f32 %v541, %v532
        %543 = vst.msk [vmem:[#allocation2] sm:$0xff] %vm360, %v542
        %s544 = scalar_lea.vmem %s281, 8 [#allocation5]
        %v545 = vld [vmem:[%s544] sm:$0xff]
        %v546 = vmul.f32 %v545, 0.35355338
        %s547 = scalar_lea.vmem %s290, 8 [#allocation8]
        %v548 = vld [vmem:[%s547] sm:$0xff]
        %s549 = scalar_lea.vmem %s299, 8 [#allocation10]
        %v550 = vld [vmem:[%s549] sm:$0xff]
        %v552 = vsel %vm360, %v546, 0
        %v555 = vsel %vm360, %v548, 0
        %557 = vmatprep.subr.mxu0 0.0
        %558 = vmatpush1.xpose.msra.mxu0 %v555
        %559 = vmatprep.subr.mxu0 0.0
        %560 = vmatpush1.xpose.msra.mxu0 0.0
        %561 = vmatprep.subr.mxu0 0.0
        %562 = vmatpush1.xpose.msra.mxu0 0.0
        %563 = vmatprep.subr.mxu0 0.0
        %564 = vmatpush1.xpose.msra.mxu0 0.0
        %565 = vmatprep.subr.mxu0 0.0
        %566 = vmatpush1.xpose.msra.mxu0 0.0
        %567 = vmatprep.subr.mxu0 0.0
        %568 = vmatpush1.xpose.msra.mxu0 0.0
        %569 = vmatprep.subr.mxu0 0.0
        %570 = vmatpush1.xpose.msra.mxu0 0.0
        %571 = vmatprep.subr.mxu0 0.0
        %572 = vmatpush1.xpose.msra.mxu0 0.0
        %573 = vmatprep.subr.mxu0 0.0
        %574 = vmatpush1.xpose.msra.mxu0 0.0
        %575 = vmatprep.subr.mxu0 0.0
        %576 = vmatpush1.xpose.msra.mxu0 0.0
        %577 = vmatprep.subr.mxu0 0.0
        %578 = vmatpush1.xpose.msra.mxu0 0.0
        %579 = vmatprep.subr.mxu0 0.0
        %580 = vmatpush1.xpose.msra.mxu0 0.0
        %581 = vmatprep.subr.mxu0 0.0
        %582 = vmatpush1.xpose.msra.mxu0 0.0
        %583 = vmatprep.subr.mxu0 0.0
        %584 = vmatpush1.xpose.msra.mxu0 0.0
        %585 = vmatprep.subr.mxu0 0.0
        %586 = vmatpush1.xpose.msra.mxu0 0.0
        %587 = vmatprep.subr.mxu0 0.0
        %588 = vmatpush1.xpose.msra.mxu0 0.0
        %589 = vmatprep.subr.mxu0 0.0
        %590 = vmatpush1.xpose.msra.mxu0 0.0
        %591 = vmatprep.subr.mxu0 0.0
        %592 = vmatpush1.xpose.msra.mxu0 0.0
        %593 = vmatprep.subr.mxu0 0.0
        %594 = vmatpush1.xpose.msra.mxu0 0.0
        %595 = vmatprep.subr.mxu0 0.0
        %596 = vmatpush1.xpose.msra.mxu0 0.0
        %597 = vmatprep.subr.mxu0 0.0
        %598 = vmatpush1.xpose.msra.mxu0 0.0
        %599 = vmatprep.subr.mxu0 0.0
        %600 = vmatpush1.xpose.msra.mxu0 0.0
        %601 = vmatprep.subr.mxu0 0.0
        %602 = vmatpush1.xpose.msra.mxu0 0.0
        %603 = vmatprep.subr.mxu0 0.0
        %604 = vmatpush1.xpose.msra.mxu0 0.0
        %605 = vmatprep.subr.mxu0 0.0
        %606 = vmatpush1.xpose.msra.mxu0 0.0
        %607 = vmatprep.subr.mxu0 0.0
        %608 = vmatpush1.xpose.msra.mxu0 0.0
        %609 = vmatprep.subr.mxu0 0.0
        %610 = vmatpush1.xpose.msra.mxu0 0.0
        %611 = vmatprep.subr.mxu0 0.0
        %612 = vmatpush1.xpose.msra.mxu0 0.0
        %613 = vmatprep.subr.mxu0 0.0
        %614 = vmatpush1.xpose.msra.mxu0 0.0
        %615 = vmatprep.subr.mxu0 0.0
        %616 = vmatpush1.xpose.msra.mxu0 0.0
        %617 = vmatprep.subr.mxu0 0.0
        %618 = vmatpush1.xpose.msra.mxu0 0.0
        %619 = vmatprep.subr.mxu0 0.0
        %620 = vmatpush1.xpose.msra.mxu0 0.0
        %621 = vmatprep.mubr.f32.mxu0 0.0
        %622 = vmatmul.mubr.f32.gmra.mrb[0].mxu0 %v552
        %v623 = vpop.f32.mrb[0].mxu0
        %v624 = vadd.f32 0.0, %v623
        %v625 = vpop.f32.mrb[0].mxu0
        %626 = vdwg.mxu0
        %s627 = scalar_lea.vmem [#allocation3], 8
        %v628 = vld [vmem:[%s627] sm:$0xff]
        %s629 = scalar_lea.vmem [#allocation4], 8
        %v630 = vld [vmem:[%s629] sm:$0xff]
        %v631 = vsel %vm360, %v624, -inf
        %632 = vmax.xlane.f32.xlu0 %v631
        %v633 = vpop.xlane.xlu0 %632
        %v634 = vmax.f32 %v628, %v633
        %v635 = vsub.f32 %v628, %v634
        %v636 = vmul.f32 %v635, 1.442695
        %v637 = vpow.pop %v636
        %639 = vset.pattern.permute.xlu0 0
        %640 = vperm.xlu0 %639, %v634
        %v641 = vpop.permute.xlu0 %640
        %v643 = vsub.f32 %v624, %v641
        %v644 = vmul.f32 %v643, 1.442695
        %v645 = vpow.pop %v644
        %v646 = vmul.f32 %v637, %v630
        %v647 = vsel %vm360, %v645, 0.0
        %648 = vadd.xlane.f32.xlu0 %v647
        %v649 = vpop.xlane.xlu0 %648
        %v650 = vadd.f32 %v646, %v649
        %651 = vst.msk [vmem:[%s629] sm:$0xff] %vm459, %v650
        %652 = vst.msk [vmem:[%s627] sm:$0xff] %vm459, %v634
        %v654 = vsel %vm360, %v645, 0
        %656 = vmatprep.subr.mxu0 0.0
        %657 = vmatpush1.msra.mxu0 %v550
        %658 = vmatprep.subr.mxu0 0.0
        %659 = vmatpush1.msra.mxu0 0.0
        %660 = vmatprep.subr.mxu0 0.0
        %661 = vmatpush1.msra.mxu0 0.0
        %662 = vmatprep.subr.mxu0 0.0
        %663 = vmatpush1.msra.mxu0 0.0
        %664 = vmatprep.subr.mxu0 0.0
        %665 = vmatpush1.msra.mxu0 0.0
        %666 = vmatprep.subr.mxu0 0.0
        %667 = vmatpush1.msra.mxu0 0.0
        %668 = vmatprep.subr.mxu0 0.0
        %669 = vmatpush1.msra.mxu0 0.0
        %670 = vmatprep.subr.mxu0 0.0
        %671 = vmatpush1.msra.mxu0 0.0
        %672 = vmatprep.subr.mxu0 0.0
        %673 = vmatpush1.msra.mxu0 0.0
        %674 = vmatprep.subr.mxu0 0.0
        %675 = vmatpush1.msra.mxu0 0.0
        %676 = vmatprep.subr.mxu0 0.0
        %677 = vmatpush1.msra.mxu0 0.0
        %678 = vmatprep.subr.mxu0 0.0
        %679 = vmatpush1.msra.mxu0 0.0
        %680 = vmatprep.subr.mxu0 0.0
        %681 = vmatpush1.msra.mxu0 0.0
        %682 = vmatprep.subr.mxu0 0.0
        %683 = vmatpush1.msra.mxu0 0.0
        %684 = vmatprep.subr.mxu0 0.0
        %685 = vmatpush1.msra.mxu0 0.0
        %686 = vmatprep.subr.mxu0 0.0
        %687 = vmatpush1.msra.mxu0 0.0
        %688 = vmatprep.subr.mxu0 0.0
        %689 = vmatpush1.msra.mxu0 0.0
        %690 = vmatprep.subr.mxu0 0.0
        %691 = vmatpush1.msra.mxu0 0.0
        %692 = vmatprep.subr.mxu0 0.0
        %693 = vmatpush1.msra.mxu0 0.0
        %694 = vmatprep.subr.mxu0 0.0
        %695 = vmatpush1.msra.mxu0 0.0
        %696 = vmatprep.subr.mxu0 0.0
        %697 = vmatpush1.msra.mxu0 0.0
        %698 = vmatprep.subr.mxu0 0.0
        %699 = vmatpush1.msra.mxu0 0.0
        %700 = vmatprep.subr.mxu0 0.0
        %701 = vmatpush1.msra.mxu0 0.0
        %702 = vmatprep.subr.mxu0 0.0
        %703 = vmatpush1.msra.mxu0 0.0
        %704 = vmatprep.subr.mxu0 0.0
        %705 = vmatpush1.msra.mxu0 0.0
        %706 = vmatprep.subr.mxu0 0.0
        %707 = vmatpush1.msra.mxu0 0.0
        %708 = vmatprep.subr.mxu0 0.0
        %709 = vmatpush1.msra.mxu0 0.0
        %710 = vmatprep.subr.mxu0 0.0
        %711 = vmatpush1.msra.mxu0 0.0
        %712 = vmatprep.subr.mxu0 0.0
        %713 = vmatpush1.msra.mxu0 0.0
        %714 = vmatprep.subr.mxu0 0.0
        %715 = vmatpush1.msra.mxu0 0.0
        %716 = vmatprep.subr.mxu0 0.0
        %717 = vmatpush1.msra.mxu0 0.0
        %718 = vmatprep.subr.mxu0 0.0
        %719 = vmatpush1.msra.mxu0 0.0
        %720 = vmatprep.mubr.f32.mxu0 0.0
        %721 = vmatmul.mubr.f32.gmra.mrb[0].mxu0 %v654
        %v722 = vpop.f32.mrb[0].mxu0
        %v723 = vadd.f32 0.0, %v722
        %v724 = vpop.f32.mrb[0].mxu0
        %725 = vdwg.mxu0
        %s726 = scalar_lea.vmem [#allocation2], 8
        %v727 = vld [vmem:[%s726] sm:$0xff]
        %729 = vset.pattern.permute.xlu0 0
        %730 = vperm.xlu0 %729, %v637
        %v731 = vpop.permute.xlu0 %730
        %v733 = vmul.f32 %v731, %v727
        %v734 = vadd.f32 %v733, %v723
        %735 = vst.msk [vmem:[%s726] sm:$0xff] %vm360, %v734
        %s736 = scalar_lea.vmem %s281, 16 [#allocation5]
        %v737 = vld [vmem:[%s736] sm:$0xff]
        %v738 = vmul.f32 %v737, 0.35355338
        %s739 = scalar_lea.vmem %s290, 16 [#allocation8]
        %v740 = vld [vmem:[%s739] sm:$0xff]
        %s741 = scalar_lea.vmem %s299, 16 [#allocation10]
        %v742 = vld [vmem:[%s741] sm:$0xff]
        %v744 = vsel %vm360, %v738, 0
        %v747 = vsel %vm360, %v740, 0
        %749 = vmatprep.subr.mxu0 0.0
        %750 = vmatpush1.xpose.msra.mxu0 %v747
        %751 = vmatprep.subr.mxu0 0.0
        %752 = vmatpush1.xpose.msra.mxu0 0.0
        %753 = vmatprep.subr.mxu0 0.0
        %754 = vmatpush1.xpose.msra.mxu0 0.0
        %755 = vmatprep.subr.mxu0 0.0
        %756 = vmatpush1.xpose.msra.mxu0 0.0
        %757 = vmatprep.subr.mxu0 0.0
        %758 = vmatpush1.xpose.msra.mxu0 0.0
        %759 = vmatprep.subr.mxu0 0.0
        %760 = vmatpush1.xpose.msra.mxu0 0.0
        %761 = vmatprep.subr.mxu0 0.0
        %762 = vmatpush1.xpose.msra.mxu0 0.0
        %763 = vmatprep.subr.mxu0 0.0
        %764 = vmatpush1.xpose.msra.mxu0 0.0
        %765 = vmatprep.subr.mxu0 0.0
        %766 = vmatpush1.xpose.msra.mxu0 0.0
        %767 = vmatprep.subr.mxu0 0.0
        %768 = vmatpush1.xpose.msra.mxu0 0.0
        %769 = vmatprep.subr.mxu0 0.0
        %770 = vmatpush1.xpose.msra.mxu0 0.0
        %771 = vmatprep.subr.mxu0 0.0
        %772 = vmatpush1.xpose.msra.mxu0 0.0
        %773 = vmatprep.subr.mxu0 0.0
        %774 = vmatpush1.xpose.msra.mxu0 0.0
        %775 = vmatprep.subr.mxu0 0.0
        %776 = vmatpush1.xpose.msra.mxu0 0.0
        %777 = vmatprep.subr.mxu0 0.0
        %778 = vmatpush1.xpose.msra.mxu0 0.0
        %779 = vmatprep.subr.mxu0 0.0
        %780 = vmatpush1.xpose.msra.mxu0 0.0
        %781 = vmatprep.subr.mxu0 0.0
        %782 = vmatpush1.xpose.msra.mxu0 0.0
        %783 = vmatprep.subr.mxu0 0.0
        %784 = vmatpush1.xpose.msra.mxu0 0.0
        %785 = vmatprep.subr.mxu0 0.0
        %786 = vmatpush1.xpose.msra.mxu0 0.0
        %787 = vmatprep.subr.mxu0 0.0
        %788 = vmatpush1.xpose.msra.mxu0 0.0
        %789 = vmatprep.subr.mxu0 0.0
        %790 = vmatpush1.xpose.msra.mxu0 0.0
        %791 = vmatprep.subr.mxu0 0.0
        %792 = vmatpush1.xpose.msra.mxu0 0.0
        %793 = vmatprep.subr.mxu0 0.0
        %794 = vmatpush1.xpose.msra.mxu0 0.0
        %795 = vmatprep.subr.mxu0 0.0
        %796 = vmatpush1.xpose.msra.mxu0 0.0
        %797 = vmatprep.subr.mxu0 0.0
        %798 = vmatpush1.xpose.msra.mxu0 0.0
        %799 = vmatprep.subr.mxu0 0.0
        %800 = vmatpush1.xpose.msra.mxu0 0.0
        %801 = vmatprep.subr.mxu0 0.0
        %802 = vmatpush1.xpose.msra.mxu0 0.0
        %803 = vmatprep.subr.mxu0 0.0
        %804 = vmatpush1.xpose.msra.mxu0 0.0
        %805 = vmatprep.subr.mxu0 0.0
        %806 = vmatpush1.xpose.msra.mxu0 0.0
        %807 = vmatprep.subr.mxu0 0.0
        %808 = vmatpush1.xpose.msra.mxu0 0.0
        %809 = vmatprep.subr.mxu0 0.0
        %810 = vmatpush1.xpose.msra.mxu0 0.0
        %811 = vmatprep.subr.mxu0 0.0
        %812 = vmatpush1.xpose.msra.mxu0 0.0
        %813 = vmatprep.mubr.f32.mxu0 0.0
        %814 = vmatmul.mubr.f32.gmra.mrb[0].mxu0 %v744
        %v815 = vpop.f32.mrb[0].mxu0
        %v816 = vadd.f32 0.0, %v815
        %v817 = vpop.f32.mrb[0].mxu0
        %818 = vdwg.mxu0
        %s819 = scalar_lea.vmem [#allocation3], 16
        %v820 = vld [vmem:[%s819] sm:$0xff]
        %s821 = scalar_lea.vmem [#allocation4], 16
        %v822 = vld [vmem:[%s821] sm:$0xff]
        %v823 = vsel %vm360, %v816, -inf
        %824 = vmax.xlane.f32.xlu0 %v823
        %v825 = vpop.xlane.xlu0 %824
        %v826 = vmax.f32 %v820, %v825
        %v827 = vsub.f32 %v820, %v826
        %v828 = vmul.f32 %v827, 1.442695
        %v829 = vpow.pop %v828
        %831 = vset.pattern.permute.xlu0 0
        %832 = vperm.xlu0 %831, %v826
        %v833 = vpop.permute.xlu0 %832
        %v835 = vsub.f32 %v816, %v833
        %v836 = vmul.f32 %v835, 1.442695
        %v837 = vpow.pop %v836
        %v838 = vmul.f32 %v829, %v822
        %v839 = vsel %vm360, %v837, 0.0
        %840 = vadd.xlane.f32.xlu0 %v839
        %v841 = vpop.xlane.xlu0 %840
        %v842 = vadd.f32 %v838, %v841
        %843 = vst.msk [vmem:[%s821] sm:$0xff] %vm459, %v842
        %844 = vst.msk [vmem:[%s819] sm:$0xff] %vm459, %v826
        %v846 = vsel %vm360, %v837, 0
        %848 = vmatprep.subr.mxu0 0.0
        %849 = vmatpush1.msra.mxu0 %v742
        %850 = vmatprep.subr.mxu0 0.0
        %851 = vmatpush1.msra.mxu0 0.0
        %852 = vmatprep.subr.mxu0 0.0
        %853 = vmatpush1.msra.mxu0 0.0
        %854 = vmatprep.subr.mxu0 0.0
        %855 = vmatpush1.msra.mxu0 0.0
        %856 = vmatprep.subr.mxu0 0.0
        %857 = vmatpush1.msra.mxu0 0.0
        %858 = vmatprep.subr.mxu0 0.0
        %859 = vmatpush1.msra.mxu0 0.0
        %860 = vmatprep.subr.mxu0 0.0
        %861 = vmatpush1.msra.mxu0 0.0
        %862 = vmatprep.subr.mxu0 0.0
        %863 = vmatpush1.msra.mxu0 0.0
        %864 = vmatprep.subr.mxu0 0.0
        %865 = vmatpush1.msra.mxu0 0.0
        %866 = vmatprep.subr.mxu0 0.0
        %867 = vmatpush1.msra.mxu0 0.0
        %868 = vmatprep.subr.mxu0 0.0
        %869 = vmatpush1.msra.mxu0 0.0
        %870 = vmatprep.subr.mxu0 0.0
        %871 = vmatpush1.msra.mxu0 0.0
        %872 = vmatprep.subr.mxu0 0.0
        %873 = vmatpush1.msra.mxu0 0.0
        %874 = vmatprep.subr.mxu0 0.0
        %875 = vmatpush1.msra.mxu0 0.0
        %876 = vmatprep.subr.mxu0 0.0
        %877 = vmatpush1.msra.mxu0 0.0
        %878 = vmatprep.subr.mxu0 0.0
        %879 = vmatpush1.msra.mxu0 0.0
        %880 = vmatprep.subr.mxu0 0.0
        %881 = vmatpush1.msra.mxu0 0.0
        %882 = vmatprep.subr.mxu0 0.0
        %883 = vmatpush1.msra.mxu0 0.0
        %884 = vmatprep.subr.mxu0 0.0
        %885 = vmatpush1.msra.mxu0 0.0
        %886 = vmatprep.subr.mxu0 0.0
        %887 = vmatpush1.msra.mxu0 0.0
        %888 = vmatprep.subr.mxu0 0.0
        %889 = vmatpush1.msra.mxu0 0.0
        %890 = vmatprep.subr.mxu0 0.0
        %891 = vmatpush1.msra.mxu0 0.0
        %892 = vmatprep.subr.mxu0 0.0
        %893 = vmatpush1.msra.mxu0 0.0
        %894 = vmatprep.subr.mxu0 0.0
        %895 = vmatpush1.msra.mxu0 0.0
        %896 = vmatprep.subr.mxu0 0.0
        %897 = vmatpush1.msra.mxu0 0.0
        %898 = vmatprep.subr.mxu0 0.0
        %899 = vmatpush1.msra.mxu0 0.0
        %900 = vmatprep.subr.mxu0 0.0
        %901 = vmatpush1.msra.mxu0 0.0
        %902 = vmatprep.subr.mxu0 0.0
        %903 = vmatpush1.msra.mxu0 0.0
        %904 = vmatprep.subr.mxu0 0.0
        %905 = vmatpush1.msra.mxu0 0.0
        %906 = vmatprep.subr.mxu0 0.0
        %907 = vmatpush1.msra.mxu0 0.0
        %908 = vmatprep.subr.mxu0 0.0
        %909 = vmatpush1.msra.mxu0 0.0
        %910 = vmatprep.subr.mxu0 0.0
        %911 = vmatpush1.msra.mxu0 0.0
        %912 = vmatprep.mubr.f32.mxu0 0.0
        %913 = vmatmul.mubr.f32.gmra.mrb[0].mxu0 %v846
        %v914 = vpop.f32.mrb[0].mxu0
        %v915 = vadd.f32 0.0, %v914
        %v916 = vpop.f32.mrb[0].mxu0
        %917 = vdwg.mxu0
        %s918 = scalar_lea.vmem [#allocation2], 16
        %v919 = vld [vmem:[%s918] sm:$0xff]
        %921 = vset.pattern.permute.xlu0 0
        %922 = vperm.xlu0 %921, %v829
        %v923 = vpop.permute.xlu0 %922
        %v925 = vmul.f32 %v923, %v919
        %v926 = vadd.f32 %v925, %v915
        %927 = vst.msk [vmem:[%s918] sm:$0xff] %vm360, %v926
        %s928 = scalar_lea.vmem %s281, 24 [#allocation5]
        %v929 = vld [vmem:[%s928] sm:$0xff]
        %v930 = vmul.f32 %v929, 0.35355338
        %s931 = scalar_lea.vmem %s290, 24 [#allocation8]
        %v932 = vld [vmem:[%s931] sm:$0xff]
        %s933 = scalar_lea.vmem %s299, 24 [#allocation10]
        %v934 = vld [vmem:[%s933] sm:$0xff]
        %v936 = vsel %vm360, %v930, 0
        %v939 = vsel %vm360, %v932, 0
        %941 = vmatprep.subr.mxu0 0.0
        %942 = vmatpush1.xpose.msra.mxu0 %v939
        %943 = vmatprep.subr.mxu0 0.0
        %944 = vmatpush1.xpose.msra.mxu0 0.0
        %945 = vmatprep.subr.mxu0 0.0
        %946 = vmatpush1.xpose.msra.mxu0 0.0
        %947 = vmatprep.subr.mxu0 0.0
        %948 = vmatpush1.xpose.msra.mxu0 0.0
        %949 = vmatprep.subr.mxu0 0.0
        %950 = vmatpush1.xpose.msra.mxu0 0.0
        %951 = vmatprep.subr.mxu0 0.0
        %952 = vmatpush1.xpose.msra.mxu0 0.0
        %953 = vmatprep.subr.mxu0 0.0
        %954 = vmatpush1.xpose.msra.mxu0 0.0
        %955 = vmatprep.subr.mxu0 0.0
        %956 = vmatpush1.xpose.msra.mxu0 0.0
        %957 = vmatprep.subr.mxu0 0.0
        %958 = vmatpush1.xpose.msra.mxu0 0.0
        %959 = vmatprep.subr.mxu0 0.0
        %960 = vmatpush1.xpose.msra.mxu0 0.0
        %961 = vmatprep.subr.mxu0 0.0
        %962 = vmatpush1.xpose.msra.mxu0 0.0
        %963 = vmatprep.subr.mxu0 0.0
        %964 = vmatpush1.xpose.msra.mxu0 0.0
        %965 = vmatprep.subr.mxu0 0.0
        %966 = vmatpush1.xpose.msra.mxu0 0.0
        %967 = vmatprep.subr.mxu0 0.0
        %968 = vmatpush1.xpose.msra.mxu0 0.0
        %969 = vmatprep.subr.mxu0 0.0
        %970 = vmatpush1.xpose.msra.mxu0 0.0
        %971 = vmatprep.subr.mxu0 0.0
        %972 = vmatpush1.xpose.msra.mxu0 0.0
        %973 = vmatprep.subr.mxu0 0.0
        %974 = vmatpush1.xpose.msra.mxu0 0.0
        %975 = vmatprep.subr.mxu0 0.0
        %976 = vmatpush1.xpose.msra.mxu0 0.0
        %977 = vmatprep.subr.mxu0 0.0
        %978 = vmatpush1.xpose.msra.mxu0 0.0
        %979 = vmatprep.subr.mxu0 0.0
        %980 = vmatpush1.xpose.msra.mxu0 0.0
        %981 = vmatprep.subr.mxu0 0.0
        %982 = vmatpush1.xpose.msra.mxu0 0.0
        %983 = vmatprep.subr.mxu0 0.0
        %984 = vmatpush1.xpose.msra.mxu0 0.0
        %985 = vmatprep.subr.mxu0 0.0
        %986 = vmatpush1.xpose.msra.mxu0 0.0
        %987 = vmatprep.subr.mxu0 0.0
        %988 = vmatpush1.xpose.msra.mxu0 0.0
        %989 = vmatprep.subr.mxu0 0.0
        %990 = vmatpush1.xpose.msra.mxu0 0.0
        %991 = vmatprep.subr.mxu0 0.0
        %992 = vmatpush1.xpose.msra.mxu0 0.0
        %993 = vmatprep.subr.mxu0 0.0
        %994 = vmatpush1.xpose.msra.mxu0 0.0
        %995 = vmatprep.subr.mxu0 0.0
        %996 = vmatpush1.xpose.msra.mxu0 0.0
        %997 = vmatprep.subr.mxu0 0.0
        %998 = vmatpush1.xpose.msra.mxu0 0.0
        %999 = vmatprep.subr.mxu0 0.0
        %1000 = vmatpush1.xpose.msra.mxu0 0.0
        %1001 = vmatprep.subr.mxu0 0.0
        %1002 = vmatpush1.xpose.msra.mxu0 0.0
        %1003 = vmatprep.subr.mxu0 0.0
        %1004 = vmatpush1.xpose.msra.mxu0 0.0
        %1005 = vmatprep.mubr.f32.mxu0 0.0
        %1006 = vmatmul.mubr.f32.gmra.mrb[0].mxu0 %v936
        %v1007 = vpop.f32.mrb[0].mxu0
        %v1008 = vadd.f32 0.0, %v1007
        %v1009 = vpop.f32.mrb[0].mxu0
        %1010 = vdwg.mxu0
        %s1011 = scalar_lea.vmem [#allocation3], 24
        %v1012 = vld [vmem:[%s1011] sm:$0xff]
        %s1013 = scalar_lea.vmem [#allocation4], 24
        %v1014 = vld [vmem:[%s1013] sm:$0xff]
        %v1015 = vsel %vm360, %v1008, -inf
        %1016 = vmax.xlane.f32.xlu0 %v1015
        %v1017 = vpop.xlane.xlu0 %1016
        %v1018 = vmax.f32 %v1012, %v1017
        %v1019 = vsub.f32 %v1012, %v1018
        %v1020 = vmul.f32 %v1019, 1.442695
        %v1021 = vpow.pop %v1020
        %1023 = vset.pattern.permute.xlu0 0
        %1024 = vperm.xlu0 %1023, %v1018
        %v1025 = vpop.permute.xlu0 %1024
        %v1027 = vsub.f32 %v1008, %v1025
        %v1028 = vmul.f32 %v1027, 1.442695
        %v1029 = vpow.pop %v1028
        %v1030 = vmul.f32 %v1021, %v1014
        %v1031 = vsel %vm360, %v1029, 0.0
        %1032 = vadd.xlane.f32.xlu0 %v1031
        %v1033 = vpop.xlane.xlu0 %1032
        %v1034 = vadd.f32 %v1030, %v1033
        %1035 = vst.msk [vmem:[%s1013] sm:$0xff] %vm459, %v1034
        %1036 = vst.msk [vmem:[%s1011] sm:$0xff] %vm459, %v1018
        %v1038 = vsel %vm360, %v1029, 0
        %1040 = vmatprep.subr.mxu0 0.0
        %1041 = vmatpush1.msra.mxu0 %v934
        %1042 = vmatprep.subr.mxu0 0.0
        %1043 = vmatpush1.msra.mxu0 0.0
        %1044 = vmatprep.subr.mxu0 0.0
        %1045 = vmatpush1.msra.mxu0 0.0
        %1046 = vmatprep.subr.mxu0 0.0
        %1047 = vmatpush1.msra.mxu0 0.0
        %1048 = vmatprep.subr.mxu0 0.0
        %1049 = vmatpush1.msra.mxu0 0.0
        %1050 = vmatprep.subr.mxu0 0.0
        %1051 = vmatpush1.msra.mxu0 0.0
        %1052 = vmatprep.subr.mxu0 0.0
        %1053 = vmatpush1.msra.mxu0 0.0
        %1054 = vmatprep.subr.mxu0 0.0
        %1055 = vmatpush1.msra.mxu0 0.0
        %1056 = vmatprep.subr.mxu0 0.0
        %1057 = vmatpush1.msra.mxu0 0.0
        %1058 = vmatprep.subr.mxu0 0.0
        %1059 = vmatpush1.msra.mxu0 0.0
        %1060 = vmatprep.subr.mxu0 0.0
        %1061 = vmatpush1.msra.mxu0 0.0
        %1062 = vmatprep.subr.mxu0 0.0
        %1063 = vmatpush1.msra.mxu0 0.0
        %1064 = vmatprep.subr.mxu0 0.0
        %1065 = vmatpush1.msra.mxu0 0.0
        %1066 = vmatprep.subr.mxu0 0.0
        %1067 = vmatpush1.msra.mxu0 0.0
        %1068 = vmatprep.subr.mxu0 0.0
        %1069 = vmatpush1.msra.mxu0 0.0
        %1070 = vmatprep.subr.mxu0 0.0
        %1071 = vmatpush1.msra.mxu0 0.0
        %1072 = vmatprep.subr.mxu0 0.0
        %1073 = vmatpush1.msra.mxu0 0.0
        %1074 = vmatprep.subr.mxu0 0.0
        %1075 = vmatpush1.msra.mxu0 0.0
        %1076 = vmatprep.subr.mxu0 0.0
        %1077 = vmatpush1.msra.mxu0 0.0
        %1078 = vmatprep.subr.mxu0 0.0
        %1079 = vmatpush1.msra.mxu0 0.0
        %1080 = vmatprep.subr.mxu0 0.0
        %1081 = vmatpush1.msra.mxu0 0.0
        %1082 = vmatprep.subr.mxu0 0.0
        %1083 = vmatpush1.msra.mxu0 0.0
        %1084 = vmatprep.subr.mxu0 0.0
        %1085 = vmatpush1.msra.mxu0 0.0
        %1086 = vmatprep.subr.mxu0 0.0
        %1087 = vmatpush1.msra.mxu0 0.0
        %1088 = vmatprep.subr.mxu0 0.0
        %1089 = vmatpush1.msra.mxu0 0.0
        %1090 = vmatprep.subr.mxu0 0.0
        %1091 = vmatpush1.msra.mxu0 0.0
        %1092 = vmatprep.subr.mxu0 0.0
        %1093 = vmatpush1.msra.mxu0 0.0
        %1094 = vmatprep.subr.mxu0 0.0
        %1095 = vmatpush1.msra.mxu0 0.0
        %1096 = vmatprep.subr.mxu0 0.0
        %1097 = vmatpush1.msra.mxu0 0.0
        %1098 = vmatprep.subr.mxu0 0.0
        %1099 = vmatpush1.msra.mxu0 0.0
        %1100 = vmatprep.subr.mxu0 0.0
        %1101 = vmatpush1.msra.mxu0 0.0
        %1102 = vmatprep.subr.mxu0 0.0
        %1103 = vmatpush1.msra.mxu0 0.0
        %1104 = vmatprep.mubr.f32.mxu0 0.0
        %1105 = vmatmul.mubr.f32.gmra.mrb[0].mxu0 %v1038
        %v1106 = vpop.f32.mrb[0].mxu0
        %v1107 = vadd.f32 0.0, %v1106
        %v1108 = vpop.f32.mrb[0].mxu0
        %1109 = vdwg.mxu0
        %s1110 = scalar_lea.vmem [#allocation2], 24
        %v1111 = vld [vmem:[%s1110] sm:$0xff]
        %1113 = vset.pattern.permute.xlu0 0
        %1114 = vperm.xlu0 %1113, %v1021
        %v1115 = vpop.permute.xlu0 %1114
        %v1117 = vmul.f32 %v1115, %v1111
        %v1118 = vadd.f32 %v1117, %v1107
        %1119 = vst.msk [vmem:[%s1110] sm:$0xff] %vm360, %v1118
        // Predicated region
        $region57: #{tpu_custom_call.1} parent=35 // pred_check
          %p1120 = pneg %p338
        $region58: #{tpu_custom_call.1} parent=35 // pred_check_branch
          %1122 = sbr.rel (%p1120) target = $region60
        $region59: #{tpu_custom_call.1} parent=35 // pred_region
          %v1123 = vld [vmem:[#allocation4] sm:$0xff]
          %v1124 = vrcp.pop %v1123
          %v1125 = vmul.f32 1.0, %v1124
          %v1126 = vld [vmem:[#allocation2] sm:$0xff]
          %1128 = vset.pattern.permute.xlu0 0
          %1129 = vperm.xlu0 %1128, %v1125
          %v1130 = vpop.permute.xlu0 %1129
          %v1132 = vmul.f32 %v1126, %v1130
          %v1133 = vld [vmem:[#allocation11] sm:$0xff]
          %v1134 = vld [vmem:[%s629] sm:$0xff]
          %v1135 = vrcp.pop %v1134
          %v1136 = vmul.f32 1.0, %v1135
          %v1137 = vld [vmem:[%s726] sm:$0xff]
          %1139 = vset.pattern.permute.xlu0 0
          %1140 = vperm.xlu0 %1139, %v1136
          %v1141 = vpop.permute.xlu0 %1140
          %v1143 = vmul.f32 %v1137, %v1141
          %s1144 = scalar_lea.vmem [#allocation11], 8
          %v1145 = vld [vmem:[%s1144] sm:$0xff]
          %v1147 = vsel %vm360, %v1143, 0
          %1149 = vmatprep.subr.mxu0 0.0
          %1150 = vmatpush1.msra.mxu0 %v1145
          %1151 = vmatprep.subr.mxu0 0.0
          %1152 = vmatpush1.msra.mxu0 0.0
          %1153 = vmatprep.subr.mxu0 0.0
          %1154 = vmatpush1.msra.mxu0 0.0
          %1155 = vmatprep.subr.mxu0 0.0
          %1156 = vmatpush1.msra.mxu0 0.0
          %1157 = vmatprep.subr.mxu0 0.0
          %1158 = vmatpush1.msra.mxu0 0.0
          %1159 = vmatprep.subr.mxu0 0.0
          %1160 = vmatpush1.msra.mxu0 0.0
          %1161 = vmatprep.subr.mxu0 0.0
          %1162 = vmatpush1.msra.mxu0 0.0
          %1163 = vmatprep.subr.mxu0 0.0
          %1164 = vmatpush1.msra.mxu0 0.0
          %1165 = vmatprep.subr.mxu0 0.0
          %1166 = vmatpush1.msra.mxu0 0.0
          %1167 = vmatprep.subr.mxu0 0.0
          %1168 = vmatpush1.msra.mxu0 0.0
          %1169 = vmatprep.subr.mxu0 0.0
          %1170 = vmatpush1.msra.mxu0 0.0
          %1171 = vmatprep.subr.mxu0 0.0
          %1172 = vmatpush1.msra.mxu0 0.0
          %1173 = vmatprep.subr.mxu0 0.0
          %1174 = vmatpush1.msra.mxu0 0.0
          %1175 = vmatprep.subr.mxu0 0.0
          %1176 = vmatpush1.msra.mxu0 0.0
          %1177 = vmatprep.subr.mxu0 0.0
          %1178 = vmatpush1.msra.mxu0 0.0
          %1179 = vmatprep.subr.mxu0 0.0
          %1180 = vmatpush1.msra.mxu0 0.0
          %1181 = vmatprep.subr.mxu0 0.0
          %1182 = vmatpush1.msra.mxu0 0.0
          %1183 = vmatprep.subr.mxu0 0.0
          %1184 = vmatpush1.msra.mxu0 0.0
          %1185 = vmatprep.subr.mxu0 0.0
          %1186 = vmatpush1.msra.mxu0 0.0
          %1187 = vmatprep.subr.mxu0 0.0
          %1188 = vmatpush1.msra.mxu0 0.0
          %1189 = vmatprep.subr.mxu0 0.0
          %1190 = vmatpush1.msra.mxu0 0.0
          %1191 = vmatprep.subr.mxu0 0.0
          %1192 = vmatpush1.msra.mxu0 0.0
          %1193 = vmatprep.subr.mxu0 0.0
          %1194 = vmatpush1.msra.mxu0 0.0
          %1195 = vmatprep.subr.mxu0 0.0
          %1196 = vmatpush1.msra.mxu0 0.0
          %1197 = vmatprep.subr.mxu0 0.0
          %1198 = vmatpush1.msra.mxu0 0.0
          %1199 = vmatprep.subr.mxu0 0.0
          %1200 = vmatpush1.msra.mxu0 0.0
          %1201 = vmatprep.subr.mxu0 0.0
          %1202 = vmatpush1.msra.mxu0 0.0
          %1203 = vmatprep.subr.mxu0 0.0
          %1204 = vmatpush1.msra.mxu0 0.0
          %1205 = vmatprep.subr.mxu0 0.0
          %1206 = vmatpush1.msra.mxu0 0.0
          %1207 = vmatprep.subr.mxu0 0.0
          %1208 = vmatpush1.msra.mxu0 0.0
          %1209 = vmatprep.subr.mxu0 0.0
          %1210 = vmatpush1.msra.mxu0 0.0
          %1211 = vmatprep.subr.mxu0 0.0
          %1212 = vmatpush1.msra.mxu0 0.0
          %1213 = vmatprep.mubr.f32.mxu0 0.0
          %1214 = vmatmul.mubr.f32.gmra.mrb[0].mxu0 %v1147
          %v1215 = vpop.f32.mrb[0].mxu0
          %v1216 = vadd.f32 0.0, %v1215
          %v1217 = vpop.f32.mrb[0].mxu0
          %1218 = vdwg.mxu0
          %v1220 = vsel %vm360, %v1132, 0
          %1222 = vmatprep.subr.mxu0 0.0
          %1223 = vmatpush1.msra.mxu0 %v1133
          %1224 = vmatprep.subr.mxu0 0.0
          %1225 = vmatpush1.msra.mxu0 0.0
          %1226 = vmatprep.subr.mxu0 0.0
          %1227 = vmatpush1.msra.mxu0 0.0
          %1228 = vmatprep.subr.mxu0 0.0
          %1229 = vmatpush1.msra.mxu0 0.0
          %1230 = vmatprep.subr.mxu0 0.0
          %1231 = vmatpush1.msra.mxu0 0.0
          %1232 = vmatprep.subr.mxu0 0.0
          %1233 = vmatpush1.msra.mxu0 0.0
          %1234 = vmatprep.subr.mxu0 0.0
          %1235 = vmatpush1.msra.mxu0 0.0
          %1236 = vmatprep.subr.mxu0 0.0
          %1237 = vmatpush1.msra.mxu0 0.0
          %1238 = vmatprep.subr.mxu0 0.0
          %1239 = vmatpush1.msra.mxu0 0.0
          %1240 = vmatprep.subr.mxu0 0.0
          %1241 = vmatpush1.msra.mxu0 0.0
          %1242 = vmatprep.subr.mxu0 0.0
          %1243 = vmatpush1.msra.mxu0 0.0
          %1244 = vmatprep.subr.mxu0 0.0
          %1245 = vmatpush1.msra.mxu0 0.0
          %1246 = vmatprep.subr.mxu0 0.0
          %1247 = vmatpush1.msra.mxu0 0.0
          %1248 = vmatprep.subr.mxu0 0.0
          %1249 = vmatpush1.msra.mxu0 0.0
          %1250 = vmatprep.subr.mxu0 0.0
          %1251 = vmatpush1.msra.mxu0 0.0
          %1252 = vmatprep.subr.mxu0 0.0
          %1253 = vmatpush1.msra.mxu0 0.0
          %1254 = vmatprep.subr.mxu0 0.0
          %1255 = vmatpush1.msra.mxu0 0.0
          %1256 = vmatprep.subr.mxu0 0.0
          %1257 = vmatpush1.msra.mxu0 0.0
          %1258 = vmatprep.subr.mxu0 0.0
          %1259 = vmatpush1.msra.mxu0 0.0
          %1260 = vmatprep.subr.mxu0 0.0
          %1261 = vmatpush1.msra.mxu0 0.0
          %1262 = vmatprep.subr.mxu0 0.0
          %1263 = vmatpush1.msra.mxu0 0.0
          %1264 = vmatprep.subr.mxu0 0.0
          %1265 = vmatpush1.msra.mxu0 0.0
          %1266 = vmatprep.subr.mxu0 0.0
          %1267 = vmatpush1.msra.mxu0 0.0
          %1268 = vmatprep.subr.mxu0 0.0
          %1269 = vmatpush1.msra.mxu0 0.0
          %1270 = vmatprep.subr.mxu0 0.0
          %1271 = vmatpush1.msra.mxu0 0.0
          %1272 = vmatprep.subr.mxu0 0.0
          %1273 = vmatpush1.msra.mxu0 0.0
          %1274 = vmatprep.subr.mxu0 0.0
          %1275 = vmatpush1.msra.mxu0 0.0
          %1276 = vmatprep.subr.mxu0 0.0
          %1277 = vmatpush1.msra.mxu0 0.0
          %1278 = vmatprep.subr.mxu0 0.0
          %1279 = vmatpush1.msra.mxu0 0.0
          %1280 = vmatprep.subr.mxu0 0.0
          %1281 = vmatpush1.msra.mxu0 0.0
          %1282 = vmatprep.subr.mxu0 0.0
          %1283 = vmatpush1.msra.mxu0 0.0
          %1284 = vmatprep.subr.mxu0 0.0
          %1285 = vmatpush1.msra.mxu0 0.0
          %1286 = vmatprep.mubr.f32.mxu0 0.0
          %1287 = vmatmul.mubr.f32.gmra.mrb[0].mxu0 %v1220
          %v1288 = vpop.f32.mrb[0].mxu0
          %v1289 = vadd.f32 %v1216, %v1288
          %v1290 = vpop.f32.mrb[0].mxu0
          %1291 = vdwg.mxu0
          %v1292 = vld [vmem:[%s821] sm:$0xff]
          %v1293 = vrcp.pop %v1292
          %v1294 = vmul.f32 1.0, %v1293
          %v1295 = vld [vmem:[%s918] sm:$0xff]
          %1297 = vset.pattern.permute.xlu0 0
          %1298 = vperm.xlu0 %1297, %v1294
          %v1299 = vpop.permute.xlu0 %1298
          %v1301 = vmul.f32 %v1295, %v1299
          %s1302 = scalar_lea.vmem [#allocation11], 16
          %v1303 = vld [vmem:[%s1302] sm:$0xff]
          %v1305 = vsel %vm360, %v1301, 0
          %1307 = vmatprep.subr.mxu0 0.0
          %1308 = vmatpush1.msra.mxu0 %v1303
          %1309 = vmatprep.subr.mxu0 0.0
          %1310 = vmatpush1.msra.mxu0 0.0
          %1311 = vmatprep.subr.mxu0 0.0
          %1312 = vmatpush1.msra.mxu0 0.0
          %1313 = vmatprep.subr.mxu0 0.0
          %1314 = vmatpush1.msra.mxu0 0.0
          %1315 = vmatprep.subr.mxu0 0.0
          %1316 = vmatpush1.msra.mxu0 0.0
          %1317 = vmatprep.subr.mxu0 0.0
          %1318 = vmatpush1.msra.mxu0 0.0
          %1319 = vmatprep.subr.mxu0 0.0
          %1320 = vmatpush1.msra.mxu0 0.0
          %1321 = vmatprep.subr.mxu0 0.0
          %1322 = vmatpush1.msra.mxu0 0.0
          %1323 = vmatprep.subr.mxu0 0.0
          %1324 = vmatpush1.msra.mxu0 0.0
          %1325 = vmatprep.subr.mxu0 0.0
          %1326 = vmatpush1.msra.mxu0 0.0
          %1327 = vmatprep.subr.mxu0 0.0
          %1328 = vmatpush1.msra.mxu0 0.0
          %1329 = vmatprep.subr.mxu0 0.0
          %1330 = vmatpush1.msra.mxu0 0.0
          %1331 = vmatprep.subr.mxu0 0.0
          %1332 = vmatpush1.msra.mxu0 0.0
          %1333 = vmatprep.subr.mxu0 0.0
          %1334 = vmatpush1.msra.mxu0 0.0
          %1335 = vmatprep.subr.mxu0 0.0
          %1336 = vmatpush1.msra.mxu0 0.0
          %1337 = vmatprep.subr.mxu0 0.0
          %1338 = vmatpush1.msra.mxu0 0.0
          %1339 = vmatprep.subr.mxu0 0.0
          %1340 = vmatpush1.msra.mxu0 0.0
          %1341 = vmatprep.subr.mxu0 0.0
          %1342 = vmatpush1.msra.mxu0 0.0
          %1343 = vmatprep.subr.mxu0 0.0
          %1344 = vmatpush1.msra.mxu0 0.0
          %1345 = vmatprep.subr.mxu0 0.0
          %1346 = vmatpush1.msra.mxu0 0.0
          %1347 = vmatprep.subr.mxu0 0.0
          %1348 = vmatpush1.msra.mxu0 0.0
          %1349 = vmatprep.subr.mxu0 0.0
          %1350 = vmatpush1.msra.mxu0 0.0
          %1351 = vmatprep.subr.mxu0 0.0
          %1352 = vmatpush1.msra.mxu0 0.0
          %1353 = vmatprep.subr.mxu0 0.0
          %1354 = vmatpush1.msra.mxu0 0.0
          %1355 = vmatprep.subr.mxu0 0.0
          %1356 = vmatpush1.msra.mxu0 0.0
          %1357 = vmatprep.subr.mxu0 0.0
          %1358 = vmatpush1.msra.mxu0 0.0
          %1359 = vmatprep.subr.mxu0 0.0
          %1360 = vmatpush1.msra.mxu0 0.0
          %1361 = vmatprep.subr.mxu0 0.0
          %1362 = vmatpush1.msra.mxu0 0.0
          %1363 = vmatprep.subr.mxu0 0.0
          %1364 = vmatpush1.msra.mxu0 0.0
          %1365 = vmatprep.subr.mxu0 0.0
          %1366 = vmatpush1.msra.mxu0 0.0
          %1367 = vmatprep.subr.mxu0 0.0
          %1368 = vmatpush1.msra.mxu0 0.0
          %1369 = vmatprep.subr.mxu0 0.0
          %1370 = vmatpush1.msra.mxu0 0.0
          %1371 = vmatprep.mubr.f32.mxu0 0.0
          %1372 = vmatmul.mubr.f32.gmra.mrb[0].mxu0 %v1305
          %v1373 = vpop.f32.mrb[0].mxu0
          %v1374 = vadd.f32 0.0, %v1373
          %v1375 = vpop.f32.mrb[0].mxu0
          %1376 = vdwg.mxu0
          %v1377 = vadd.f32 %v1289, %v1374
          %v1378 = vld [vmem:[%s1013] sm:$0xff]
          %v1379 = vrcp.pop %v1378
          %v1380 = vmul.f32 1.0, %v1379
          %v1381 = vld [vmem:[%s1110] sm:$0xff]
          %1383 = vset.pattern.permute.xlu0 0
          %1384 = vperm.xlu0 %1383, %v1380
          %v1385 = vpop.permute.xlu0 %1384
          %v1387 = vmul.f32 %v1381, %v1385
          %s1388 = scalar_lea.vmem [#allocation11], 24
          %v1389 = vld [vmem:[%s1388] sm:$0xff]
          %v1391 = vsel %vm360, %v1387, 0
          %1393 = vmatprep.subr.mxu0 0.0
          %1394 = vmatpush1.msra.mxu0 %v1389
          %1395 = vmatprep.subr.mxu0 0.0
          %1396 = vmatpush1.msra.mxu0 0.0
          %1397 = vmatprep.subr.mxu0 0.0
          %1398 = vmatpush1.msra.mxu0 0.0
          %1399 = vmatprep.subr.mxu0 0.0
          %1400 = vmatpush1.msra.mxu0 0.0
          %1401 = vmatprep.subr.mxu0 0.0
          %1402 = vmatpush1.msra.mxu0 0.0
          %1403 = vmatprep.subr.mxu0 0.0
          %1404 = vmatpush1.msra.mxu0 0.0
          %1405 = vmatprep.subr.mxu0 0.0
          %1406 = vmatpush1.msra.mxu0 0.0
          %1407 = vmatprep.subr.mxu0 0.0
          %1408 = vmatpush1.msra.mxu0 0.0
          %1409 = vmatprep.subr.mxu0 0.0
          %1410 = vmatpush1.msra.mxu0 0.0
          %1411 = vmatprep.subr.mxu0 0.0
          %1412 = vmatpush1.msra.mxu0 0.0
          %1413 = vmatprep.subr.mxu0 0.0
          %1414 = vmatpush1.msra.mxu0 0.0
          %1415 = vmatprep.subr.mxu0 0.0
          %1416 = vmatpush1.msra.mxu0 0.0
          %1417 = vmatprep.subr.mxu0 0.0
          %1418 = vmatpush1.msra.mxu0 0.0
          %1419 = vmatprep.subr.mxu0 0.0
          %1420 = vmatpush1.msra.mxu0 0.0
          %1421 = vmatprep.subr.mxu0 0.0
          %1422 = vmatpush1.msra.mxu0 0.0
          %1423 = vmatprep.subr.mxu0 0.0
          %1424 = vmatpush1.msra.mxu0 0.0
          %1425 = vmatprep.subr.mxu0 0.0
          %1426 = vmatpush1.msra.mxu0 0.0
          %1427 = vmatprep.subr.mxu0 0.0
          %1428 = vmatpush1.msra.mxu0 0.0
          %1429 = vmatprep.subr.mxu0 0.0
          %1430 = vmatpush1.msra.mxu0 0.0
          %1431 = vmatprep.subr.mxu0 0.0
          %1432 = vmatpush1.msra.mxu0 0.0
          %1433 = vmatprep.subr.mxu0 0.0
          %1434 = vmatpush1.msra.mxu0 0.0
          %1435 = vmatprep.subr.mxu0 0.0
          %1436 = vmatpush1.msra.mxu0 0.0
          %1437 = vmatprep.subr.mxu0 0.0
          %1438 = vmatpush1.msra.mxu0 0.0
          %1439 = vmatprep.subr.mxu0 0.0
          %1440 = vmatpush1.msra.mxu0 0.0
          %1441 = vmatprep.subr.mxu0 0.0
          %1442 = vmatpush1.msra.mxu0 0.0
          %1443 = vmatprep.subr.mxu0 0.0
          %1444 = vmatpush1.msra.mxu0 0.0
          %1445 = vmatprep.subr.mxu0 0.0
          %1446 = vmatpush1.msra.mxu0 0.0
          %1447 = vmatprep.subr.mxu0 0.0
          %1448 = vmatpush1.msra.mxu0 0.0
          %1449 = vmatprep.subr.mxu0 0.0
          %1450 = vmatpush1.msra.mxu0 0.0
          %1451 = vmatprep.subr.mxu0 0.0
          %1452 = vmatpush1.msra.mxu0 0.0
          %1453 = vmatprep.subr.mxu0 0.0
          %1454 = vmatpush1.msra.mxu0 0.0
          %1455 = vmatprep.subr.mxu0 0.0
          %1456 = vmatpush1.msra.mxu0 0.0
          %1457 = vmatprep.mubr.f32.mxu0 0.0
          %1458 = vmatmul.mubr.f32.gmra.mrb[0].mxu0 %v1391
          %v1459 = vpop.f32.mrb[0].mxu0
          %v1460 = vadd.f32 0.0, %v1459
          %v1461 = vpop.f32.mrb[0].mxu0
          %1462 = vdwg.mxu0
          %v1463 = vadd.f32 %v1377, %v1460
          %vm1464 = vcmask 261120
          %1465 = vst.msk [vmem:[%s337] sm:$0xff] %vm1464, %v1463
        $region60: #{tpu_custom_call.1} parent=35 // pred_fallthru
          _
        %s1466 = sand.u32 %s159, 1
        %s1467 = scalar_lea.sflag [#allocation7], %s1466
        %s1468 = sand.u32 %s159, 1
        %s1469 = smul.addr %s1468, 8
        %s1470 = scalar_lea.vmem [#allocation13], %s1469
        // Predicated region
        $region61: #{tpu_custom_call.1} parent=35 // pred_check
          %p1471 = pneg %p169
        $region62: #{tpu_custom_call.1} parent=35 // pred_check_branch
          %1473 = sbr.rel (%p1471) target = $region64
        $region63: #{tpu_custom_call.1} parent=35 // pred_region
          %s1475 = ssub.s32 128, 128
          %1476 = vsyncadd %s1467, %s1475
          %s1477 = sadd.s32 %s31, %s30
          %s1478 = smul.addr %s1477, 128
          %s1479 = scalar_lea.hbm %s4, %s1478
          %s1481 = sshll.u32 %s1470, 4
          %s1482 = int_to_ptr.vmem [resolvable:$true] %s1481
          %1484 = dma.vmem_to_hbm [thread:$0]  %s1482, 128, %s1479, %s1467
        $region64: #{tpu_custom_call.1} parent=35 // pred_fallthru
          _
      $region36: #{tpu_custom_call.1} parent=5 // pred_fallthru
        _
      %p1485 = scmp.le.s32.totalorder 2, %s20
      // Predicated region
      $region65: #{tpu_custom_call.1} parent=5 // pred_check
        %p1486 = pneg %p1485
      $region66: #{tpu_custom_call.1} parent=5 // pred_check_branch
        %1488 = sbr.rel (%p1486) target = $region68
      $region67: #{tpu_custom_call.1} parent=5 // pred_region
        %s1489 = ssub.s32 %s20, 2
        // Predicated region
        $region69: #{tpu_custom_call.1} parent=67 // pred_check
          %p1490 = pneg %p175
        $region70: #{tpu_custom_call.1} parent=67 // pred_check_branch
          %1492 = sbr.rel (%p1490) target = $region72
        $region71: #{tpu_custom_call.1} parent=67 // pred_region
          %s1493 = sand.u32 %s160, 1
          %s1494 = scalar_lea.sflag [#allocation7], %s1493
          %s1495 = sand.u32 %s160, 1
          %s1496 = smul.addr %s1495, 8
          %s1497 = scalar_lea.vmem [#allocation13], %s1496
          %1498 = dma.done %s1494, 128
        $region72: #{tpu_custom_call.1} parent=67 // pred_fallthru
          _
      $region68: #{tpu_custom_call.1} parent=5 // pred_fallthru
        _
    $region6: #{tpu_custom_call.1} parent=1 // loop_footer
      %s24 = sadd.s32 1, %s20
    $region7: #{tpu_custom_call.1} parent=1 // loop_footer_branch
      %19 = sbr.rel target = $region3
    $region8: #{tpu_custom_call.1} parent=1 // loop_exit
      _
    %1499 = vsyncpa [#allocation6], 1
    %s1500 = scalar_lea.sflag [#allocation6], 1
    %1501 = vsyncpa %s1500, 1
    %1502 = vsyncpa [#allocation9], 1
    %s1503 = scalar_lea.sflag [#allocation9], 1
    %1504 = vsyncpa %s1503, 1
    %1505 = vsyncpa [#allocation12], 1
    %1506 = vsyncpa [#allocation7], 1
    %s1507 = scalar_lea.sflag [#allocation7], 1
    %1508 = vsyncpa %s1507, 1

</llo_original>
